<compile_context>
chip_gen: v6e
topology: v6e:2x2x1
jax: 0.10.0
libtpu: 0.0.40
codegen_flags: <defaults>
</compile_context>

<pallas_src>
import functools

import jax
import jax.numpy as jnp
from jax.experimental import pallas as pl
from jax.experimental.pallas import tpu as pltpu

_CompilerParams = getattr(pltpu, "CompilerParams", None) or getattr(pltpu, "TPUCompilerParams")


def _round_up(a, b):
    return (a + b - 1) // b * b


def _vmem_budget():
    try:
        cap = pltpu.get_tpu_info().vmem_capacity_bytes
    except Exception:
        cap = 64 * 1024 * 1024            # conservative (v7x-sized) fallback
    return int(cap * 0.8)


def _pick_tile(n_pad, f, h, c_pad, budget):
    """Largest node-tile (multiple of 128) whose working set fits the VMEM budget."""
    fixed = 12 * c_pad * n_pad                                # z ping-pong + hidden (f32)
    fixed += 8 * (h * f + h + c_pad * h + c_pad)              # resident weights (dbl-buffered)
    fixed += 2 << 20                                          # compiler slack
    tn = n_pad
    while tn > 128:
        per_tile = 2 * (n_pad * tn * 2                        # A_hat^T tile (bf16, 2 bufs)
                        + f * tn * 4                          # x^T tile
                        + c_pad * tn * 4)                     # out tile
        if fixed + per_tile <= budget:
            return tn
        tn -= 128
    return 128


def garnoldi_kernel(K, C, xT_ref, w1T_ref, b1T_ref, w2T_ref, b2T_ref,
                    ahatT_ref, temp_ref, out_ref, z_scr, hid_scr):
    s = pl.program_id(0)              # 0 = fused MLP, 1..K-1 = propagation steps
    j = pl.program_id(1)              # node-column tile
    c_pad, tn = out_ref.shape
    col = pl.multiple_of(j * tn, 128)

    # ---- step 0: fused MLP, writes z0^T and hidden^T tiles into persistent VMEM ----
    @pl.when(s == 0)
    def _mlp():
        h = jnp.dot(w1T_ref[...], xT_ref[...],
                    preferred_element_type=jnp.float32) + b1T_ref[...]
        h = jnp.maximum(h, 0.0)
        z0 = jnp.dot(w2T_ref[...], h,
                     preferred_element_type=jnp.float32) + b2T_ref[...]      # (c_pad, tn)
        z_scr[0, :, pl.ds(col, tn)] = z0
        hid_scr[:, pl.ds(col, tn)] = temp_ref[K - 1] * z0

    # ---- steps 1..K-1: z_new^T[:, tile] = z^T @ A_hat^T[:, tile] + temp[k]*hidden^T ----
    def _prop(src, dst):
        a_t = ahatT_ref[...]                                   # (n_pad, tn) bf16
        z_prev = z_scr[src].astype(a_t.dtype)                  # (c_pad, n_pad) -> bf16
        prod = jnp.dot(z_prev, a_t, preferred_element_type=jnp.float32)
        gamma = temp_ref[K - 1 - s]                            # scalar from SMEM
        z_new = prod + gamma * hid_scr[:, pl.ds(col, tn)]
        z_scr[dst, :, pl.ds(col, tn)] = z_new

        @pl.when(s == K - 1)
        def _finalize():                                       # log_softmax over classes
            logits = z_new
            if C < c_pad:                                      # mask padded class rows
                cls = jax.lax.broadcasted_iota(jnp.int32, logits.shape, 0)
                logits = jnp.where(cls < C, logits, -1e30)
            m = jnp.max(logits, axis=0, keepdims=True)
            sh = logits - m
            lse = jnp.log(jnp.sum(jnp.exp(sh), axis=0, keepdims=True))
            out_ref[...] = (sh - lse).astype(out_ref.dtype)

    odd = jax.lax.rem(s, 2) == 1

    @pl.when(jnp.logical_and(s > 0, odd))
    def _():
        _prop(0, 1)

    @pl.when(jnp.logical_and(s > 0, jnp.logical_not(odd)))
    def _():
        _prop(1, 0)


def garnoldi_forward(x, w1, b1, w2, b2, a_hat, temp, tile_override=None):
    """GARNOLDI forward.  x:(N,F), w1:(F,H), b1:(1,H)|(H,), w2:(H,C), b2:(1,C)|(C,),
    a_hat:(N,N) dense gcn-normalized adjacency, temp:(K+1,).  Returns (N,C) log-probs."""
    x = jnp.asarray(x, jnp.float32)
    a_hat = jnp.asarray(a_hat, jnp.float32)
    temp = jnp.asarray(temp, jnp.float32)
    N, F = x.shape
    H = w1.shape[1]
    C = w2.shape[1]
    K = temp.shape[0] - 1
    assert K >= 2, "kernel assumes at least one propagation step (K >= 2)"

    c_pad = _round_up(max(C, 8), 8)
    n128 = _round_up(N, 128)
    budget = _vmem_budget()
    if tile_override is not None:
        tn = min(_round_up(tile_override, 128), n128)
    else:
        tn = _pick_tile(n128, F, H, c_pad, budget)
    n_pad = _round_up(n128, tn)
    nj = n_pad // tn

    # Lane-dense transposed + zero-padded operands (padded nodes/classes never leak:
    # padded A_hat rows/cols are zero and padded outputs are sliced off below).
    xT = jnp.zeros((F, n_pad), jnp.float32).at[:, :N].set(x.T)
    w1T = jnp.asarray(w1, jnp.float32).T                                      # (H, F)
    b1T = jnp.asarray(b1, jnp.float32).reshape(-1)[:, None]                   # (H, 1)
    w2T = jnp.zeros((c_pad, H), jnp.float32).at[:C, :].set(jnp.asarray(w2, jnp.float32).T)
    b2T = jnp.zeros((c_pad, 1), jnp.float32).at[:C, 0].set(jnp.asarray(b2, jnp.float32).reshape(-1))
    ahatT = jnp.zeros((n_pad, n_pad), jnp.bfloat16).at[:N, :N].set(a_hat.T.astype(jnp.bfloat16))

    kernel = functools.partial(garnoldi_kernel, K, C)

    outT = pl.pallas_call(
        kernel,
        out_shape=jax.ShapeDtypeStruct((c_pad, n_pad), jnp.float32),
        grid=(K, nj),
        in_specs=[
            # x^T tiles: only needed at s == 0; afterwards pin block 0 (no re-DMA).
            pl.BlockSpec((F, tn), lambda s, j: (0, jnp.where(s == 0, j, 0))),
            pl.BlockSpec((H, F), lambda s, j: (0, 0)),        # W1^T (VMEM-resident)
            pl.BlockSpec((H, 1), lambda s, j: (0, 0)),        # b1^T
            pl.BlockSpec((c_pad, H), lambda s, j: (0, 0)),    # W2^T
            pl.BlockSpec((c_pad, 1), lambda s, j: (0, 0)),    # b2^T
            # A_hat^T tiles: pinned during the MLP step, streamed afterwards.
            # When nj == 1 the index is constant -> one DMA, resident across all steps.
            pl.BlockSpec((n_pad, tn), lambda s, j: (0, jnp.where(s == 0, 0, j))),
            pl.BlockSpec(memory_space=pltpu.MemorySpace.SMEM),   # temp coefficients
        ],
        # Output only becomes valid at the last step; keep its block pinned until then
        # so each output block is written back to HBM exactly once, lane-dense.
        out_specs=pl.BlockSpec((c_pad, tn), lambda s, j: (0, jnp.where(s == K - 1, j, 0))),
        scratch_shapes=[
            pltpu.VMEM((2, c_pad, n_pad), jnp.float32),       # z ping-pong
            pltpu.VMEM((c_pad, n_pad), jnp.float32),          # hidden
        ],
        compiler_params=_CompilerParams(
            # TODO(synk): mark the node-tile axis "parallel" for v7x megacore once the
            # z/hidden scratch is moved to VMEM_SHARED with a cross-core barrier.
            dimension_semantics=("arbitrary", "arbitrary"),
            vmem_limit_bytes=budget,
        ),
    )(xT, w1T, b1T, w2T, b2T, ahatT, temp)

    return outT[:C, :N].T


def build_gcn_norm_dense(edge_index, num_nodes):
    """Dense equivalent of gcn_norm: D^{-1/2} (A + I) D^{-1/2} (self-loop fill=1)."""
    row, col = edge_index[0], edge_index[1]
    A = jnp.zeros((num_nodes, num_nodes), jnp.float32)
    A = A.at[row, col].add(1.0)
    A = A + jnp.eye(num_nodes, dtype=jnp.float32)
    deg = A.sum(axis=1)
    dinv = jnp.where(deg > 0, 1.0 / jnp.sqrt(deg), 0.0)
    return dinv[:, None] * A * dinv[None, :]


def garnoldi_reference(x, w1, b1, w2, b2, a_hat, temp, bf16_prop=True):
    """Pure-JAX reference; bf16_prop mimics the kernel's bf16 A_hat / z matmul inputs."""
    K = temp.shape[0] - 1
    h = jnp.maximum(x @ w1 + b1, 0.0)
    z = h @ w2 + b2
    hidden = temp[K - 1] * z
    a = a_hat.astype(jnp.bfloat16).astype(jnp.float32) if bf16_prop else a_hat
    for k in range(K - 2, -1, -1):
        zz = z.astype(jnp.bfloat16).astype(jnp.float32) if bf16_prop else z
        z = jnp.dot(a, zz, preferred_element_type=jnp.float32) + temp[k] * hidden
    return jax.nn.log_softmax(z, axis=1)


if __name__ == "__main__":
    # Small deterministic synthetic setup (N deliberately not a multiple of 128 so the
    # padding path is exercised).
    N, F, H, C = 500, 32, 32, 8
    K, alpha = 8, 0.1

    key = jax.random.PRNGKey(0)
    k1, k2, k3, k4, k5, k6, k7 = jax.random.split(key, 7)

    x = jax.random.normal(k1, (N, F), jnp.float32)
    w1 = jax.random.normal(k2, (F, H), jnp.float32) * (1.0 / jnp.sqrt(F))
    b1 = jax.random.normal(k3, (1, H), jnp.float32) * 0.1
    w2 = jax.random.normal(k4, (H, C), jnp.float32) * (1.0 / jnp.sqrt(H))
    b2 = jax.random.normal(k5, (1, C), jnp.float32) * 0.1

    E = 2000
    src = jax.random.randint(k6, (E,), 0, N)
    dst = jax.random.randint(k7, (E,), 0, N)
    edge_index = jnp.stack(
        [jnp.concatenate([src, dst]), jnp.concatenate([dst, src])], axis=0)
    a_hat = build_gcn_norm_dense(edge_index, N)

    # PPR initialization of the (K+1,) coefficient vector `temp`
    temp = alpha * (1.0 - alpha) ** jnp.arange(K + 1, dtype=jnp.float32)
    temp = temp.at[-1].set((1.0 - alpha) ** K)
    # TODO(synk): Monomial/Chebyshev/Legendre/Jacobi coefficient fitting
    # (compare_fit_panelA / filter_jackson) is host-side preprocessing, not kernel work.

    ref = garnoldi_reference(x, w1, b1, w2, b2, a_hat, temp)

    # Auto-sized tile (A_hat fully VMEM-resident at this N: single DMA across all steps).
    out = garnoldi_forward(x, w1, b1, w2, b2, a_hat, temp)
    jax.block_until_ready(out)
    assert out.shape == (N, C)
    assert bool(jnp.allclose(out, ref, atol=5e-2, rtol=5e-2))

    # Forced small tile: exercises the streamed / multi-tile propagation path.
    out_tiled = garnoldi_forward(x, w1, b1, w2, b2, a_hat, temp, tile_override=128)
    jax.block_until_ready(out_tiled)
    assert bool(jnp.allclose(out_tiled, ref, atol=5e-2, rtol=5e-2))

    print("KERNEL_OK")
</pallas_src>

<mosaic_0001>
module attributes {stable_mosaic.version = 11 : i64} {
  func.func @garnoldi_kernel(%arg0: i32, %arg1: i32, %arg2: memref<32x512xf32, #tpu.memory_space<vmem>>, %arg3: memref<32x32xf32, #tpu.memory_space<vmem>>, %arg4: memref<32x1xf32, #tpu.memory_space<vmem>>, %arg5: memref<8x32xf32, #tpu.memory_space<vmem>>, %arg6: memref<8x1xf32, #tpu.memory_space<vmem>>, %arg7: memref<512x512xbf16, #tpu.memory_space<vmem>>, %arg8: memref<9xf32, #tpu.memory_space<smem>>, %arg9: memref<8x512xf32, #tpu.memory_space<vmem>>, %arg10: memref<2x8x512xf32, #tpu.memory_space<vmem>>, %arg11: memref<8x512xf32, #tpu.memory_space<vmem>>) attributes {dimension_semantics = [#tpu.dimension_semantics<arbitrary>, #tpu.dimension_semantics<arbitrary>], iteration_bounds = array<i64: 8, 1>, scalar_prefetch = 0 : i64, scratch_operands = 2 : i64, tpu.core_type = #tpu.core_type<tc>, window_params = [{transform_indices = @transform_0, window_bounds = array<i64: 32, 512>}, {pipeline_mode = #tpu.pipeline_mode<synchronous>, transform_indices = @transform_1, window_bounds = array<i64: 32, 32>}, {pipeline_mode = #tpu.pipeline_mode<synchronous>, transform_indices = @transform_2, window_bounds = array<i64: 32, 1>}, {pipeline_mode = #tpu.pipeline_mode<synchronous>, transform_indices = @transform_3, window_bounds = array<i64: 8, 32>}, {pipeline_mode = #tpu.pipeline_mode<synchronous>, transform_indices = @transform_4, window_bounds = array<i64: 8, 1>}, {transform_indices = @transform_5, window_bounds = array<i64: 512, 512>}, {transform_indices = @transform_6, window_bounds = array<i64: 9>}, {transform_indices = @transform_7, window_bounds = array<i64: 8, 512>}]} {
    %c512_i32 = arith.constant 512 : i32
    %0 = arith.muli %arg1, %c512_i32 : i32
    %1 = tpu.assume_multiple %0, 128 : i32
    %c0_i32 = arith.constant 0 : i32
    %2 = arith.cmpi eq, %arg0, %c0_i32 : i32
    %3 = arith.extui %2 : i1 to i32
    %c0_i32_0 = arith.constant 0 : i32
    %4 = arith.cmpi ne, %3, %c0_i32_0 : i32
    scf.if %4 {
      %c0 = arith.constant 0 : index
      %c0_5 = arith.constant 0 : index
      %16 = vector.load %arg3[%c0, %c0_5] : memref<32x32xf32, #tpu.memory_space<vmem>>, vector<32x32xf32>
      %c0_6 = arith.constant 0 : index
      %c0_7 = arith.constant 0 : index
      %17 = vector.load %arg2[%c0_6, %c0_7] : memref<32x512xf32, #tpu.memory_space<vmem>>, vector<32x512xf32>
      %cst = arith.constant dense<0.000000e+00> : vector<32x512xf32>
      %18 = tpu.matmul %16, %17, %cst {dimension_numbers = #tpu.dot_dimension_numbers<[1], [0], [0], [1], [0, 0, 1, 1], [], []>} : vector<32x32xf32>, vector<32x512xf32>, vector<32x512xf32> -> vector<32x512xf32>
      %c0_8 = arith.constant 0 : index
      %c0_9 = arith.constant 0 : index
      %19 = vector.load %arg4[%c0_8, %c0_9] : memref<32x1xf32, #tpu.memory_space<vmem>>, vector<32x1xf32>
      %20 = vector.broadcast %19 : vector<32x1xf32> to vector<32x512xf32>
      %21 = arith.addf %18, %20 : vector<32x512xf32>
      %cst_10 = arith.constant 0.000000e+00 : f32
      %22 = vector.broadcast %cst_10 : f32 to vector<32x512xf32>
      %23 = arith.maximumf %21, %22 : vector<32x512xf32>
      %c0_11 = arith.constant 0 : index
      %c0_12 = arith.constant 0 : index
      %24 = vector.load %arg5[%c0_11, %c0_12] : memref<8x32xf32, #tpu.memory_space<vmem>>, vector<8x32xf32>
      %cst_13 = arith.constant dense<0.000000e+00> : vector<8x512xf32>
      %25 = tpu.matmul %24, %23, %cst_13 {dimension_numbers = #tpu.dot_dimension_numbers<[1], [0], [0], [1], [0, 0, 1, 1], [], []>} : vector<8x32xf32>, vector<32x512xf32>, vector<8x512xf32> -> vector<8x512xf32>
      %c0_14 = arith.constant 0 : index
      %c0_15 = arith.constant 0 : index
      %26 = vector.load %arg6[%c0_14, %c0_15] : memref<8x1xf32, #tpu.memory_space<vmem>>, vector<8x1xf32>
      %27 = vector.broadcast %26 : vector<8x1xf32> to vector<8x512xf32>
      %28 = arith.addf %25, %27 : vector<8x512xf32>
      %c0_16 = arith.constant 0 : index
      %c0_17 = arith.constant 0 : index
      %29 = arith.index_cast %1 : i32 to index
      %30 = vector.load %arg10[%c0_16, %c0_17, %29] : memref<2x8x512xf32, #tpu.memory_space<vmem>>, vector<1x8x512xf32>
      %31 = vector.shape_cast %30 : vector<1x8x512xf32> to vector<8x512xf32>
      %32 = vector.shape_cast %28 : vector<8x512xf32> to vector<1x8x512xf32>
      tpu.vector_store %arg10[%c0_16, %c0_17, %29], %32 {strides = array<i32>} : memref<2x8x512xf32, #tpu.memory_space<vmem>>, vector<1x8x512xf32>,
      %c7 = arith.constant 7 : index
      %33 = memref.load %arg8[%c7] : memref<9xf32, #tpu.memory_space<smem>>
      %34 = vector.broadcast %33 : f32 to vector<8x512xf32>
      %35 = arith.mulf %34, %28 : vector<8x512xf32>
      %c0_18 = arith.constant 0 : index
      %36 = arith.index_cast %1 : i32 to index
      %37 = vector.load %arg11[%c0_18, %36] : memref<8x512xf32, #tpu.memory_space<vmem>>, vector<8x512xf32>
      tpu.vector_store %arg11[%c0_18, %36], %35 {strides = array<i32>} : memref<8x512xf32, #tpu.memory_space<vmem>>, vector<8x512xf32>,
    } else {
    }
    %c2_i32 = arith.constant 2 : i32
    %5 = arith.remsi %arg0, %c2_i32 : i32
    %c1_i32 = arith.constant 1 : i32
    %6 = arith.cmpi eq, %5, %c1_i32 : i32
    %c0_i32_1 = arith.constant 0 : i32
    %7 = arith.cmpi sgt, %arg0, %c0_i32_1 : i32
    %8 = arith.andi %7, %6 : i1
    %9 = arith.extui %8 : i1 to i32
    %c0_i32_2 = arith.constant 0 : i32
    %10 = arith.cmpi ne, %9, %c0_i32_2 : i32
    scf.if %10 {
      %c0 = arith.constant 0 : index
      %c0_5 = arith.constant 0 : index
      %16 = vector.load %arg7[%c0, %c0_5] : memref<512x512xbf16, #tpu.memory_space<vmem>>, vector<512x512xbf16>
      %c0_6 = arith.constant 0 : index
      %c0_7 = arith.constant 0 : index
      %c0_8 = arith.constant 0 : index
      %17 = vector.load %arg10[%c0_6, %c0_7, %c0_8] : memref<2x8x512xf32, #tpu.memory_space<vmem>>, vector<1x8x512xf32>
      %18 = vector.shape_cast %17 : vector<1x8x512xf32> to vector<8x512xf32>
      %19 = arith.truncf %18 : vector<8x512xf32> to vector<8x512xbf16>
      %cst = arith.constant dense<0.000000e+00> : vector<8x512xf32>
      %20 = tpu.matmul %19, %16, %cst {dimension_numbers = #tpu.dot_dimension_numbers<[1], [0], [0], [1], [0, 0, 1, 1], [], []>} : vector<8x512xbf16>, vector<512x512xbf16>, vector<8x512xf32> -> vector<8x512xf32>
      %c7_i32 = arith.constant 7 : i32
      %21 = arith.subi %c7_i32, %arg0 : i32
      %22 = arith.index_cast %21 : i32 to index
      %23 = memref.load %arg8[%22] : memref<9xf32, #tpu.memory_space<smem>>
      %c0_9 = arith.constant 0 : index
      %24 = arith.index_cast %1 : i32 to index
      %25 = vector.load %arg11[%c0_9, %24] : memref<8x512xf32, #tpu.memory_space<vmem>>, vector<8x512xf32>
      %26 = vector.broadcast %23 : f32 to vector<8x512xf32>
      %27 = arith.mulf %26, %25 : vector<8x512xf32>
      %28 = arith.addf %20, %27 : vector<8x512xf32>
      %c1 = arith.constant 1 : index
      %c0_10 = arith.constant 0 : index
      %29 = arith.index_cast %1 : i32 to index
      %30 = vector.load %arg10[%c1, %c0_10, %29] : memref<2x8x512xf32, #tpu.memory_space<vmem>>, vector<1x8x512xf32>
      %31 = vector.shape_cast %30 : vector<1x8x512xf32> to vector<8x512xf32>
      %32 = vector.shape_cast %28 : vector<8x512xf32> to vector<1x8x512xf32>
      tpu.vector_store %arg10[%c1, %c0_10, %29], %32 {strides = array<i32>} : memref<2x8x512xf32, #tpu.memory_space<vmem>>, vector<1x8x512xf32>,
      %c7_i32_11 = arith.constant 7 : i32
      %33 = arith.cmpi eq, %arg0, %c7_i32_11 : i32
      %34 = arith.extui %33 : i1 to i32
      %c0_i32_12 = arith.constant 0 : i32
      %35 = arith.cmpi ne, %34, %c0_i32_12 : i32
      scf.if %35 {
        %cst_13 = arith.constant dense<0xFF800000> : vector<512xf32>
        %36 = vector.multi_reduction <maximumf>, %28, %cst_13 [0] : vector<8x512xf32> to vector<512xf32>
        %37 = vector.shape_cast %36 : vector<512xf32> to vector<1x512xf32>
        %38 = vector.broadcast %37 : vector<1x512xf32> to vector<8x512xf32>
        %39 = arith.subf %28, %38 : vector<8x512xf32>
        %40 = math.exp %39 : vector<8x512xf32>
        %cst_14 = arith.constant dense<0.000000e+00> : vector<512xf32>
        %41 = vector.multi_reduction <add>, %40, %cst_14 [0] : vector<8x512xf32> to vector<512xf32>
        %42 = vector.shape_cast %41 : vector<512xf32> to vector<1x512xf32>
        %43 = math.log %42 : vector<1x512xf32>
        %44 = vector.broadcast %43 : vector<1x512xf32> to vector<8x512xf32>
        %45 = arith.subf %39, %44 : vector<8x512xf32>
        %c0_15 = arith.constant 0 : index
        %c0_16 = arith.constant 0 : index
        %46 = vector.load %arg9[%c0_15, %c0_16] : memref<8x512xf32, #tpu.memory_space<vmem>>, vector<8x512xf32>
        tpu.vector_store %arg9[%c0_15, %c0_16], %45 {strides = array<i32>} : memref<8x512xf32, #tpu.memory_space<vmem>>, vector<8x512xf32>,
      } else {
      }
    } else {
    }
    %c0_i32_3 = arith.constant 0 : i32
    %11 = arith.cmpi sgt, %arg0, %c0_i32_3 : i32
    %true = arith.constant true
    %12 = arith.xori %6, %true : i1
    %13 = arith.andi %11, %12 : i1
    %14 = arith.extui %13 : i1 to i32
    %c0_i32_4 = arith.constant 0 : i32
    %15 = arith.cmpi ne, %14, %c0_i32_4 : i32
    scf.if %15 {
      %c0 = arith.constant 0 : index
      %c0_5 = arith.constant 0 : index
      %16 = vector.load %arg7[%c0, %c0_5] : memref<512x512xbf16, #tpu.memory_space<vmem>>, vector<512x512xbf16>
      %c1 = arith.constant 1 : index
      %c0_6 = arith.constant 0 : index
      %c0_7 = arith.constant 0 : index
      %17 = vector.load %arg10[%c1, %c0_6, %c0_7] : memref<2x8x512xf32, #tpu.memory_space<vmem>>, vector<1x8x512xf32>
      %18 = vector.shape_cast %17 : vector<1x8x512xf32> to vector<8x512xf32>
      %19 = arith.truncf %18 : vector<8x512xf32> to vector<8x512xbf16>
      %cst = arith.constant dense<0.000000e+00> : vector<8x512xf32>
      %20 = tpu.matmul %19, %16, %cst {dimension_numbers = #tpu.dot_dimension_numbers<[1], [0], [0], [1], [0, 0, 1, 1], [], []>} : vector<8x512xbf16>, vector<512x512xbf16>, vector<8x512xf32> -> vector<8x512xf32>
      %c7_i32 = arith.constant 7 : i32
      %21 = arith.subi %c7_i32, %arg0 : i32
      %22 = arith.index_cast %21 : i32 to index
      %23 = memref.load %arg8[%22] : memref<9xf32, #tpu.memory_space<smem>>
      %c0_8 = arith.constant 0 : index
      %24 = arith.index_cast %1 : i32 to index
      %25 = vector.load %arg11[%c0_8, %24] : memref<8x512xf32, #tpu.memory_space<vmem>>, vector<8x512xf32>
      %26 = vector.broadcast %23 : f32 to vector<8x512xf32>
      %27 = arith.mulf %26, %25 : vector<8x512xf32>
      %28 = arith.addf %20, %27 : vector<8x512xf32>
      %c0_9 = arith.constant 0 : index
      %c0_10 = arith.constant 0 : index
      %29 = arith.index_cast %1 : i32 to index
      %30 = vector.load %arg10[%c0_9, %c0_10, %29] : memref<2x8x512xf32, #tpu.memory_space<vmem>>, vector<1x8x512xf32>
      %31 = vector.shape_cast %30 : vector<1x8x512xf32> to vector<8x512xf32>
      %32 = vector.shape_cast %28 : vector<8x512xf32> to vector<1x8x512xf32>
      tpu.vector_store %arg10[%c0_9, %c0_10, %29], %32 {strides = array<i32>} : memref<2x8x512xf32, #tpu.memory_space<vmem>>, vector<1x8x512xf32>,
      %c7_i32_11 = arith.constant 7 : i32
      %33 = arith.cmpi eq, %arg0, %c7_i32_11 : i32
      %34 = arith.extui %33 : i1 to i32
      %c0_i32_12 = arith.constant 0 : i32
      %35 = arith.cmpi ne, %34, %c0_i32_12 : i32
      scf.if %35 {
        %cst_13 = arith.constant dense<0xFF800000> : vector<512xf32>
        %36 = vector.multi_reduction <maximumf>, %28, %cst_13 [0] : vector<8x512xf32> to vector<512xf32>
        %37 = vector.shape_cast %36 : vector<512xf32> to vector<1x512xf32>
        %38 = vector.broadcast %37 : vector<1x512xf32> to vector<8x512xf32>
        %39 = arith.subf %28, %38 : vector<8x512xf32>
        %40 = math.exp %39 : vector<8x512xf32>
        %cst_14 = arith.constant dense<0.000000e+00> : vector<512xf32>
        %41 = vector.multi_reduction <add>, %40, %cst_14 [0] : vector<8x512xf32> to vector<512xf32>
        %42 = vector.shape_cast %41 : vector<512xf32> to vector<1x512xf32>
        %43 = math.log %42 : vector<1x512xf32>
        %44 = vector.broadcast %43 : vector<1x512xf32> to vector<8x512xf32>
        %45 = arith.subf %39, %44 : vector<8x512xf32>
        %c0_15 = arith.constant 0 : index
        %c0_16 = arith.constant 0 : index
        %46 = vector.load %arg9[%c0_15, %c0_16] : memref<8x512xf32, #tpu.memory_space<vmem>>, vector<8x512xf32>
        tpu.vector_store %arg9[%c0_15, %c0_16], %45 {strides = array<i32>} : memref<8x512xf32, #tpu.memory_space<vmem>>, vector<8x512xf32>,
      } else {
      }
    } else {
    }
    return
  }
  func.func @transform_0(%arg0: i32, %arg1: i32) -> (i32, i32) {
    %c0_i32 = arith.constant 0 : i32
    %0 = arith.cmpi eq, %arg0, %c0_i32 : i32
    %c0_i32_0 = arith.constant 0 : i32
    %1 = arith.select %0, %arg1, %c0_i32_0 : i32
    %c0_i32_1 = arith.constant 0 : i32
    %c0_i32_2 = arith.constant 0 : i32
    return %c0_i32_1, %1 : i32, i32
  }
  func.func @transform_1(%arg0: i32, %arg1: i32) -> (i32, i32) {
    %c0_i32 = arith.constant 0 : i32
    %c0_i32_0 = arith.constant 0 : i32
    %c0_i32_1 = arith.constant 0 : i32
    return %c0_i32, %c0_i32_0 : i32, i32
  }
  func.func @transform_2(%arg0: i32, %arg1: i32) -> (i32, i32) {
    %c0_i32 = arith.constant 0 : i32
    %c0_i32_0 = arith.constant 0 : i32
    %c0_i32_1 = arith.constant 0 : i32
    return %c0_i32, %c0_i32_0 : i32, i32
  }
  func.func @transform_3(%arg0: i32, %arg1: i32) -> (i32, i32) {
    %c0_i32 = arith.constant 0 : i32
    %c0_i32_0 = arith.constant 0 : i32
    %c0_i32_1 = arith.constant 0 : i32
    return %c0_i32, %c0_i32_0 : i32, i32
  }
  func.func @transform_4(%arg0: i32, %arg1: i32) -> (i32, i32) {
    %c0_i32 = arith.constant 0 : i32
    %c0_i32_0 = arith.constant 0 : i32
    %c0_i32_1 = arith.constant 0 : i32
    return %c0_i32, %c0_i32_0 : i32, i32
  }
  func.func @transform_5(%arg0: i32, %arg1: i32) -> (i32, i32) {
    %c0_i32 = arith.constant 0 : i32
    %0 = arith.cmpi eq, %arg0, %c0_i32 : i32
    %c0_i32_0 = arith.constant 0 : i32
    %1 = arith.select %0, %c0_i32_0, %arg1 : i32
    %c0_i32_1 = arith.constant 0 : i32
    %c0_i32_2 = arith.constant 0 : i32
    return %c0_i32_1, %1 : i32, i32
  }
  func.func @transform_6(%arg0: i32, %arg1: i32) -> i32 {
    %c0_i32 = arith.constant 0 : i32
    %c0_i32_0 = arith.constant 0 : i32
    return %c0_i32 : i32
  }
  func.func @transform_7(%arg0: i32, %arg1: i32) -> (i32, i32) {
    %c7_i32 = arith.constant 7 : i32
    %0 = arith.cmpi eq, %arg0, %c7_i32 : i32
    %c0_i32 = arith.constant 0 : i32
    %1 = arith.select %0, %arg1, %c0_i32 : i32
    %c0_i32_0 = arith.constant 0 : i32
    %c0_i32_1 = arith.constant 0 : i32
    return %c0_i32_0, %1 : i32, i32
  }
}

</mosaic_0001>

<llo_original>
// kernel: tpu_custom_call.1
$region0: #{tpu_custom_call.1}
  #allocation0 [shape = 'u32[]', space=smem, size = 0x4, offset = 0x4, fixed_abs, tag = 'smem constant byte address 0x4 - core index']
  #allocation1 [shape = 'u32[144,128]{1,0:T(1,128)}', space=vmem, size = 0x12000, scoped, tag = 'internal scratch']
  #allocation2 [shape = 'f32[2,8,512]{2,1,0:T(8,128)}', space=vmem, size = 0x8000, scoped, tag = 'scratch operand']
  #allocation3 [shape = 'f32[8,512]{1,0:T(8,128)}', space=vmem, size = 0x4000, scoped, tag = 'scratch operand']
  %s0 = inlined_call_operand.hbm [shape: f32[32,512], index: 0, kind: input, shape index: {}]
  %s1 = inlined_call_operand.vmem [shape: f32[32,32], index: 1, kind: input, shape index: {}]
  %s2 = inlined_call_operand.vmem [shape: f32[32,1], index: 2, kind: input, shape index: {}]
  %s3 = inlined_call_operand.vmem [shape: f32[8,32], index: 3, kind: input, shape index: {}]
  %s4 = inlined_call_operand.vmem [shape: f32[8,1], index: 4, kind: input, shape index: {}]
  %s5 = inlined_call_operand.hbm [shape: bf16[512,512], index: 5, kind: input, shape index: {}]
  %s6 = inlined_call_operand.vmem [shape: f32[9], index: 6, kind: input, shape index: {}]
  %s7 = inlined_call_operand.hbm [shape: f32[8,512], index: 7, kind: output, shape index: {}]
  %s8 = sld [smem:[#allocation0]]
  $region93: #{tpu_custom_call.1} parent=0
    _
  %s10 = ssub.s32 1, %s8
  %s11 = scalar_select 0, %s10, %s8
  $region1: #{tpu_custom_call.1} parent=0
    #allocation4 [shape = 'u8[131072]{0}', space=vmem, size = 0x20000, scoped, tag = 'input window, operand 0']
    #allocation5 [shape = 's32[2]{0}', space=sflag, size = 0x8, scoped, tag = 'scoped memory for tpu_custom_call.1']
    #allocation6 [shape = 's32[2]{0}', space=sflag, size = 0x8, scoped, tag = 'scoped memory for tpu_custom_call.1']
    #allocation7 [shape = 's32[2]{0}', space=sflag, size = 0x8, scoped, tag = 'scoped memory for tpu_custom_call.1']
    #allocation8 [shape = 'u8[1048576]{0}', space=vmem, size = 0x100000, scoped, tag = 'input window, operand 5']
    #allocation9 [shape = 's32[2]{0}', space=sflag, size = 0x8, scoped, tag = 'scoped memory for tpu_custom_call.1']
    #allocation10 [shape = 'u8[512]{0}', space=smem, size = 0x200, scoped, tag = 'input window, operand 6, single buffered']
    #allocation11 [shape = 'u8[32768]{0}', space=vmem, size = 0x8000, scoped, tag = 'output window, operand 0']
    %12 = vsyncpa [#allocation5], 0
    %s13 = scalar_lea.sflag [#allocation5], 1
    %14 = vsyncpa %s13, 0
    %15 = vsyncpa [#allocation9], 0
    %s16 = scalar_lea.sflag [#allocation9], 1
    %17 = vsyncpa %s16, 0
    %18 = vsyncpa [#allocation7], 0
    %19 = vsyncpa [#allocation6], 0
    %s20 = scalar_lea.sflag [#allocation6], 1
    %21 = vsyncpa %s20, 0
    loop: start=0, step=1, limit=10
    $region2: #{tpu_custom_call.1} parent=1 // loop_pre_header
      _
    $region3: #{tpu_custom_call.1} parent=1 // loop_header
      %s23 = sphi 0, %s27
      %p24 = scmp.ge.s32.totalorder %s23, 10
      %s30 = sphi 0, %s42
      %s31 = sphi 0, %s38
      %s32 = sphi 0, %s30
      %s33 = sphi 0, %s31
      %s34 = sphi 0, %s32
      %s35 = sphi 0, %s33
      %s49 = sphi 0, %s51
      %s52 = sphi 0, %s49
      %s53 = sphi 0, %s52
      %s69 = sphi 0, %s53
      %s73 = sphi 0, %s73
      %s75 = sphi 0, %s73
      %s76 = sphi 0, %s75
      %s90 = sphi 0, %s76
      %s94 = sphi 0, %s94
      %s96 = sphi 0, %s94
      %s97 = sphi 0, %s96
      %s111 = sphi 0, %s97
      %s115 = sphi 0, %s115
      %s117 = sphi 0, %s115
      %s118 = sphi 0, %s117
      %s132 = sphi 0, %s118
      %s136 = sphi 0, %s136
      %s138 = sphi 0, %s136
      %s139 = sphi 0, %s138
      %s153 = sphi 0, %s139
      %s163 = sphi 0, %s165
      %s166 = sphi 0, %s163
      %s167 = sphi 0, %s166
      %s183 = sphi 0, %s167
      %s187 = sphi 0, %s187
      %s189 = sphi 0, %s187
      %s190 = sphi 0, %s189
      %s204 = sphi 0, %s190
      %s214 = sphi 0, %s216
      %s217 = sphi 0, %s214
      %s218 = sphi 0, %s217
      %s234 = sphi 0, %s218
    $region4: #{tpu_custom_call.1} parent=1 // loop_header_branch
      %26 = sbr.rel (%p24) target = $region8
    $region5: #{tpu_custom_call.1} parent=1 // loop_body
      %s28 = ssub.s32 %s23, 1
      %s29 = ssub.s32 %s23, 2
      %s36 = sadd.s32 1, %s31
      %p37 = scmp.ge.s32.totalorder %s36, 1
      %s38 = scalar_select %p37, 0, %s36
      %s39 = sadd.s32 1, %s30
      %s40 = scalar_select %p37, %s39, %s30
      %p41 = scmp.ge.s32.totalorder %s40, 8
      %s42 = scalar_select %p41, 0, %s40
      %p43 = scmp.eq.s32.totalorder %s30, 0
      %s44 = scalar_select %p43, %s31, 0
      %p45 = scmp.eq.s32.totalorder %s42, 0
      %s46 = scalar_select %p45, %s38, 0
      %s47 = ssub.s32 %s44, %s46
      %p48 = scmp.eq.s32.totalorder %s47, 0
      %s50 = sadd.s32 %s49, 1
      %s51 = scalar_select %p48, %s49, %s50
      %p54 = pneg %p48
      %p55 = scmp.eq.s32.totalorder %s23, 7
      %p56 = por %p54, %p55
      %p57 = scmp.ne.s32.totalorder %s49, %s52
      %p58 = scmp.eq.s32.totalorder %s23, 0
      %p59 = por %p57, %p58
      %p60 = scmp.ne.s32.totalorder %s49, %s52
      %p61 = scmp.eq.s32.totalorder %s28, 7
      %p62 = por %p60, %p61
      %p63 = scmp.ne.s32.totalorder %s52, %s53
      %p64 = scmp.eq.s32.totalorder %s28, 0
      %p65 = por %p63, %p64
      %p66 = scmp.ne.s32.totalorder %s52, %s53
      %p67 = scmp.eq.s32.totalorder %s29, 7
      %p68 = por %p66, %p67
      %p70 = scmp.ne.s32.totalorder %s53, %s69
      %p71 = scmp.eq.s32.totalorder %s29, 0
      %p72 = por %p70, %p71
      %s74 = sadd.s32 %s73, 1
      %p77 = scmp.eq.s32.totalorder %s23, 7
      %p78 = scmp.ne.s32.totalorder %s73, %s75
      %p79 = scmp.eq.s32.totalorder %s23, 0
      %p80 = por %p78, %p79
      %p81 = scmp.ne.s32.totalorder %s73, %s75
      %p82 = scmp.eq.s32.totalorder %s28, 7
      %p83 = por %p81, %p82
      %p84 = scmp.ne.s32.totalorder %s75, %s76
      %p85 = scmp.eq.s32.totalorder %s28, 0
      %p86 = por %p84, %p85
      %p87 = scmp.ne.s32.totalorder %s75, %s76
      %p88 = scmp.eq.s32.totalorder %s29, 7
      %p89 = por %p87, %p88
      %p91 = scmp.ne.s32.totalorder %s76, %s90
      %p92 = scmp.eq.s32.totalorder %s29, 0
      %p93 = por %p91, %p92
      %s95 = sadd.s32 %s94, 1
      %p98 = scmp.eq.s32.totalorder %s23, 7
      %p99 = scmp.ne.s32.totalorder %s94, %s96
      %p100 = scmp.eq.s32.totalorder %s23, 0
      %p101 = por %p99, %p100
      %p102 = scmp.ne.s32.totalorder %s94, %s96
      %p103 = scmp.eq.s32.totalorder %s28, 7
      %p104 = por %p102, %p103
      %p105 = scmp.ne.s32.totalorder %s96, %s97
      %p106 = scmp.eq.s32.totalorder %s28, 0
      %p107 = por %p105, %p106
      %p108 = scmp.ne.s32.totalorder %s96, %s97
      %p109 = scmp.eq.s32.totalorder %s29, 7
      %p110 = por %p108, %p109
      %p112 = scmp.ne.s32.totalorder %s97, %s111
      %p113 = scmp.eq.s32.totalorder %s29, 0
      %p114 = por %p112, %p113
      %s116 = sadd.s32 %s115, 1
      %p119 = scmp.eq.s32.totalorder %s23, 7
      %p120 = scmp.ne.s32.totalorder %s115, %s117
      %p121 = scmp.eq.s32.totalorder %s23, 0
      %p122 = por %p120, %p121
      %p123 = scmp.ne.s32.totalorder %s115, %s117
      %p124 = scmp.eq.s32.totalorder %s28, 7
      %p125 = por %p123, %p124
      %p126 = scmp.ne.s32.totalorder %s117, %s118
      %p127 = scmp.eq.s32.totalorder %s28, 0
      %p128 = por %p126, %p127
      %p129 = scmp.ne.s32.totalorder %s117, %s118
      %p130 = scmp.eq.s32.totalorder %s29, 7
      %p131 = por %p129, %p130
      %p133 = scmp.ne.s32.totalorder %s118, %s132
      %p134 = scmp.eq.s32.totalorder %s29, 0
      %p135 = por %p133, %p134
      %s137 = sadd.s32 %s136, 1
      %p140 = scmp.eq.s32.totalorder %s23, 7
      %p141 = scmp.ne.s32.totalorder %s136, %s138
      %p142 = scmp.eq.s32.totalorder %s23, 0
      %p143 = por %p141, %p142
      %p144 = scmp.ne.s32.totalorder %s136, %s138
      %p145 = scmp.eq.s32.totalorder %s28, 7
      %p146 = por %p144, %p145
      %p147 = scmp.ne.s32.totalorder %s138, %s139
      %p148 = scmp.eq.s32.totalorder %s28, 0
      %p149 = por %p147, %p148
      %p150 = scmp.ne.s32.totalorder %s138, %s139
      %p151 = scmp.eq.s32.totalorder %s29, 7
      %p152 = por %p150, %p151
      %p154 = scmp.ne.s32.totalorder %s139, %s153
      %p155 = scmp.eq.s32.totalorder %s29, 0
      %p156 = por %p154, %p155
      %p157 = scmp.eq.s32.totalorder %s30, 0
      %s158 = scalar_select %p157, 0, %s31
      %p159 = scmp.eq.s32.totalorder %s42, 0
      %s160 = scalar_select %p159, 0, %s38
      %s161 = ssub.s32 %s158, %s160
      %p162 = scmp.eq.s32.totalorder %s161, 0
      %s164 = sadd.s32 %s163, 1
      %s165 = scalar_select %p162, %s163, %s164
      %p168 = pneg %p162
      %p169 = scmp.eq.s32.totalorder %s23, 7
      %p170 = por %p168, %p169
      %p171 = scmp.ne.s32.totalorder %s163, %s166
      %p172 = scmp.eq.s32.totalorder %s23, 0
      %p173 = por %p171, %p172
      %p174 = scmp.ne.s32.totalorder %s163, %s166
      %p175 = scmp.eq.s32.totalorder %s28, 7
      %p176 = por %p174, %p175
      %p177 = scmp.ne.s32.totalorder %s166, %s167
      %p178 = scmp.eq.s32.totalorder %s28, 0
      %p179 = por %p177, %p178
      %p180 = scmp.ne.s32.totalorder %s166, %s167
      %p181 = scmp.eq.s32.totalorder %s29, 7
      %p182 = por %p180, %p181
      %p184 = scmp.ne.s32.totalorder %s167, %s183
      %p185 = scmp.eq.s32.totalorder %s29, 0
      %p186 = por %p184, %p185
      %s188 = sadd.s32 %s187, 1
      %p191 = scmp.eq.s32.totalorder %s23, 7
      %p192 = scmp.ne.s32.totalorder %s187, %s189
      %p193 = scmp.eq.s32.totalorder %s23, 0
      %p194 = por %p192, %p193
      %p195 = scmp.ne.s32.totalorder %s187, %s189
      %p196 = scmp.eq.s32.totalorder %s28, 7
      %p197 = por %p195, %p196
      %p198 = scmp.ne.s32.totalorder %s189, %s190
      %p199 = scmp.eq.s32.totalorder %s28, 0
      %p200 = por %p198, %p199
      %p201 = scmp.ne.s32.totalorder %s189, %s190
      %p202 = scmp.eq.s32.totalorder %s29, 7
      %p203 = por %p201, %p202
      %p205 = scmp.ne.s32.totalorder %s190, %s204
      %p206 = scmp.eq.s32.totalorder %s29, 0
      %p207 = por %p205, %p206
      %p208 = scmp.eq.s32.totalorder %s30, 7
      %s209 = scalar_select %p208, %s31, 0
      %p210 = scmp.eq.s32.totalorder %s42, 7
      %s211 = scalar_select %p210, %s38, 0
      %s212 = ssub.s32 %s209, %s211
      %p213 = scmp.eq.s32.totalorder %s212, 0
      %s215 = sadd.s32 %s214, 1
      %s216 = scalar_select %p213, %s214, %s215
      %p219 = pneg %p213
      %p220 = scmp.eq.s32.totalorder %s23, 7
      %p221 = por %p219, %p220
      %p222 = scmp.ne.s32.totalorder %s214, %s217
      %p223 = scmp.eq.s32.totalorder %s23, 0
      %p224 = por %p222, %p223
      %p225 = scmp.ne.s32.totalorder %s214, %s217
      %p226 = scmp.eq.s32.totalorder %s28, 7
      %p227 = por %p225, %p226
      %p228 = scmp.ne.s32.totalorder %s217, %s218
      %p229 = scmp.eq.s32.totalorder %s28, 0
      %p230 = por %p228, %p229
      %p231 = scmp.ne.s32.totalorder %s217, %s218
      %p232 = scmp.eq.s32.totalorder %s29, 7
      %p233 = por %p231, %p232
      %p235 = scmp.ne.s32.totalorder %s218, %s234
      %p236 = scmp.eq.s32.totalorder %s29, 0
      %p237 = por %p235, %p236
      %p238 = scmp.le.s32.totalorder 1, %s23
      %p239 = scmp.lt.s32.totalorder %s23, 9
      %p240 = pnand %p238, %p239
      %p241 = pneg %p240
      // Predicated region
      $region9: #{tpu_custom_call.1} parent=5 // pred_check
        _
      $region10: #{tpu_custom_call.1} parent=5 // pred_check_branch
        %243 = sbr.rel (%p240) target = $region12
      $region11: #{tpu_custom_call.1} parent=5 // pred_region
        %s244 = ssub.s32 %s23, 1
        // Predicated region
        $region13: #{tpu_custom_call.1} parent=11 // pred_check
          %p245 = pneg %p86
        $region14: #{tpu_custom_call.1} parent=11 // pred_check_branch
          %247 = sbr.rel (%p245) target = $region16
        $region15: #{tpu_custom_call.1} parent=11 // pred_region
          _
        $region16: #{tpu_custom_call.1} parent=11 // pred_fallthru
          _
        // Predicated region
        $region17: #{tpu_custom_call.1} parent=11 // pred_check
          %p248 = pneg %p107
        $region18: #{tpu_custom_call.1} parent=11 // pred_check_branch
          %250 = sbr.rel (%p248) target = $region20
        $region19: #{tpu_custom_call.1} parent=11 // pred_region
          _
        $region20: #{tpu_custom_call.1} parent=11 // pred_fallthru
          _
        // Predicated region
        $region21: #{tpu_custom_call.1} parent=11 // pred_check
          %p251 = pneg %p128
        $region22: #{tpu_custom_call.1} parent=11 // pred_check_branch
          %253 = sbr.rel (%p251) target = $region24
        $region23: #{tpu_custom_call.1} parent=11 // pred_region
          _
        $region24: #{tpu_custom_call.1} parent=11 // pred_fallthru
          _
        // Predicated region
        $region25: #{tpu_custom_call.1} parent=11 // pred_check
          %p254 = pneg %p149
        $region26: #{tpu_custom_call.1} parent=11 // pred_check_branch
          %256 = sbr.rel (%p254) target = $region28
        $region27: #{tpu_custom_call.1} parent=11 // pred_region
          _
        $region28: #{tpu_custom_call.1} parent=11 // pred_fallthru
          _
        // Predicated region
        $region29: #{tpu_custom_call.1} parent=11 // pred_check
          %p257 = pneg %p200
        $region30: #{tpu_custom_call.1} parent=11 // pred_check_branch
          %259 = sbr.rel (%p257) target = $region32
        $region31: #{tpu_custom_call.1} parent=11 // pred_region
          %s261 = ssub.s32 16, 16
          %262 = vsyncadd [#allocation7], %s261
          %s264 = sshll.u32 %s6, 4
          %s265 = int_to_ptr.vmem [resolvable:$true] %s264
          %267 = dma.vmem_to_smem %s265, 16, [#allocation10], [#allocation7]
        $region32: #{tpu_custom_call.1} parent=11 // pred_fallthru
          _
      $region12: #{tpu_custom_call.1} parent=5 // pred_fallthru
        _
      %p268 = scmp.lt.s32.totalorder %s23, 8
      // Predicated region
      $region33: #{tpu_custom_call.1} parent=5 // pred_check
        %p269 = pneg %p268
      $region34: #{tpu_custom_call.1} parent=5 // pred_check_branch
        %271 = sbr.rel (%p269) target = $region36
      $region35: #{tpu_custom_call.1} parent=5 // pred_region
        // Predicated region
        $region37: #{tpu_custom_call.1} parent=35 // pred_check
          %p272 = pneg %p59
        $region38: #{tpu_custom_call.1} parent=35 // pred_check_branch
          %274 = sbr.rel (%p272) target = $region40
        $region39: #{tpu_custom_call.1} parent=35 // pred_region
          %s275 = sand.u32 %s49, 1
          %s276 = scalar_lea.sflag [#allocation5], %s275
          %s277 = sand.u32 %s49, 1
          %s278 = smul.addr %s277, 128
          %s279 = scalar_lea.vmem [#allocation4], %s278
          %p280 = scmp.eq.s32.totalorder %s30, 0
          %s281 = scalar_select %p280, %s31, 0
          %s282 = smul.u32 4, %s281
          %s284 = ssub.s32 2048, 2048
          %285 = vsyncadd %s276, %s284
          %s286 = smul.addr %s282, 128
          %s287 = scalar_lea.hbm %s0, %s286
          %s288 = sshll.u32 %s279, 4
          %s289 = int_to_ptr.vmem [resolvable:$true] %s288
          %294 = dma.hbm_to_vmem [thread:$0]  %s287, 2048, %s289, %s276, 512, 512, 32
        $region40: #{tpu_custom_call.1} parent=35 // pred_fallthru
          _
        // Predicated region
        $region41: #{tpu_custom_call.1} parent=35 // pred_check
          %p295 = pneg %p173
        $region42: #{tpu_custom_call.1} parent=35 // pred_check_branch
          %297 = sbr.rel (%p295) target = $region44
        $region43: #{tpu_custom_call.1} parent=35 // pred_region
          %s298 = sand.u32 %s163, 1
          %s299 = scalar_lea.sflag [#allocation9], %s298
          %s300 = sand.u32 %s163, 1
          %s301 = smul.addr %s300, 1024
          %s302 = scalar_lea.vmem [#allocation8], %s301
          %p303 = scmp.eq.s32.totalorder %s30, 0
          %s304 = scalar_select %p303, 0, %s31
          %s305 = smul.u32 4, %s304
          %s307 = ssub.s32 16384, 16384
          %308 = vsyncadd %s299, %s307
          %s309 = smul.addr %s305, 64
          %s310 = scalar_lea.hbm %s5, %s309
          %s311 = sshll.u32 %s302, 4
          %s312 = int_to_ptr.vmem [resolvable:$true] %s311
          %317 = dma.hbm_to_vmem [thread:$0]  %s310, 16384, %s312, %s299, 256, 256, 16
        $region44: #{tpu_custom_call.1} parent=35 // pred_fallthru
          _
      $region36: #{tpu_custom_call.1} parent=5 // pred_fallthru
        _
      %p318 = scmp.le.s32.totalorder 1, %s23
      %p319 = scmp.lt.s32.totalorder %s23, 9
      %p320 = pnand %p318, %p319
      %p321 = pneg %p320
      // Predicated region
      $region45: #{tpu_custom_call.1} parent=5 // pred_check
        _
      $region46: #{tpu_custom_call.1} parent=5 // pred_check_branch
        %323 = sbr.rel (%p320) target = $region48
      $region47: #{tpu_custom_call.1} parent=5 // pred_region
        %s324 = ssub.s32 %s23, 1
        %s325 = sand.u32 %s52, 1
        %s326 = scalar_lea.sflag [#allocation5], %s325
        %s327 = sand.u32 %s52, 1
        %s328 = smul.addr %s327, 128
        %s329 = scalar_lea.vmem [#allocation4], %s328
        // Predicated region
        $region49: #{tpu_custom_call.1} parent=47 // pred_check
          %p330 = pneg %p65
        $region50: #{tpu_custom_call.1} parent=47 // pred_check_branch
          %332 = sbr.rel (%p330) target = $region52
        $region51: #{tpu_custom_call.1} parent=47 // pred_region
          %333 = dma.done %s326, 2048
        $region52: #{tpu_custom_call.1} parent=47 // pred_fallthru
          _
        %s334 = sand.u32 %s166, 1
        %s335 = scalar_lea.sflag [#allocation9], %s334
        %s336 = sand.u32 %s166, 1
        %s337 = smul.addr %s336, 1024
        %s338 = scalar_lea.vmem [#allocation8], %s337
        // Predicated region
        $region53: #{tpu_custom_call.1} parent=47 // pred_check
          %p339 = pneg %p179
        $region54: #{tpu_custom_call.1} parent=47 // pred_check_branch
          %341 = sbr.rel (%p339) target = $region56
        $region55: #{tpu_custom_call.1} parent=47 // pred_region
          %342 = dma.done %s335, 16384
        $region56: #{tpu_custom_call.1} parent=47 // pred_fallthru
          _
        // Predicated region
        $region57: #{tpu_custom_call.1} parent=47 // pred_check
          %p343 = pneg %p200
        $region58: #{tpu_custom_call.1} parent=47 // pred_check_branch
          %345 = sbr.rel (%p343) target = $region60
        $region59: #{tpu_custom_call.1} parent=47 // pred_region
          %346 = dma.done [#allocation7], 16
        $region60: #{tpu_custom_call.1} parent=47 // pred_fallthru
          _
        %347 = sfence
        %s348 = sand.u32 %s52, 1
        %s349 = scalar_lea.sflag [#allocation5], %s348
        %s350 = sand.u32 %s52, 1
        %s351 = smul.addr %s350, 128
        %s352 = scalar_lea.vmem [#allocation4], %s351
        %p353 = pneg %p65
        %p354 = pneg %p62
        %p355 = pneg %p86
        %p356 = pneg %p83
        %p357 = pneg %p107
        %p358 = pneg %p104
        %p359 = pneg %p128
        %p360 = pneg %p125
        %p361 = pneg %p149
        %p362 = pneg %p146
        %s363 = sand.u32 %s166, 1
        %s364 = scalar_lea.sflag [#allocation9], %s363
        %s365 = sand.u32 %s166, 1
        %s366 = smul.addr %s365, 1024
        %s367 = scalar_lea.vmem [#allocation8], %s366
        %p368 = pneg %p179
        %p369 = pneg %p176
        %p370 = pneg %p200
        %p371 = pneg %p197
        %p372 = pneg %p230
        %p373 = pneg %p227
        %s374 = sand.u32 %s217, 1
        %s375 = scalar_lea.sflag [#allocation6], %s374
        %s376 = sand.u32 %s217, 1
        %s377 = smul.addr %s376, 32
        %s378 = scalar_lea.vmem [#allocation11], %s377
        %p379 = scmp.eq.s32.totalorder %s32, 0
        %s380 = scalar_select %p379, %s33, 0
        %s381 = smul.u32 4, %s380
        %p382 = scmp.eq.s32.totalorder %s32, 0
        %s383 = scalar_select %p382, 0, %s33
        %s384 = smul.u32 4, %s383
        %p385 = scmp.eq.s32.totalorder %s32, 7
        %s386 = scalar_select %p385, %s33, 0
        %s387 = smul.u32 4, %s386
        %s388 = smul.u32 %s33, 512
        %p389 = scmp.eq.s32.totalorder %s32, 0
        // Predicated region
        $region61: #{tpu_custom_call.1} parent=47 // pred_check
          %p390 = pneg %p389
        $region62: #{tpu_custom_call.1} parent=47 // pred_check_branch
          %392 = sbr.rel (%p390) target = $region64
        $region63: #{tpu_custom_call.1} parent=47 // pred_region
          %v393 = vld [vmem:[%s1] sm:$0xff]
          %v394 = vld [vmem:[%s1 + $0x8] sm:$0xff]
          %v395 = vld [vmem:[%s1 + $0x10] sm:$0xff]
          %v396 = vld [vmem:[%s1 + $0x18] sm:$0xff]
          %v397 = vld [vmem:[%s329] sm:$0xff]
          %v398 = vld [vmem:[%s329 + $0x8] sm:$0xff]
          %v399 = vld [vmem:[%s329 + $0x10] sm:$0xff]
          %v400 = vld [vmem:[%s329 + $0x18] sm:$0xff]
          %v401 = vld [vmem:[%s329 + $0x20] sm:$0xff]
          %v402 = vld [vmem:[%s329 + $0x28] sm:$0xff]
          %v403 = vld [vmem:[%s329 + $0x30] sm:$0xff]
          %v404 = vld [vmem:[%s329 + $0x38] sm:$0xff]
          %v405 = vld [vmem:[%s329 + $0x40] sm:$0xff]
          %v406 = vld [vmem:[%s329 + $0x48] sm:$0xff]
          %v407 = vld [vmem:[%s329 + $0x50] sm:$0xff]
          %v408 = vld [vmem:[%s329 + $0x58] sm:$0xff]
          %v409 = vld [vmem:[%s329 + $0x60] sm:$0xff]
          %v410 = vld [vmem:[%s329 + $0x68] sm:$0xff]
          %v411 = vld [vmem:[%s329 + $0x70] sm:$0xff]
          %v412 = vld [vmem:[%s329 + $0x78] sm:$0xff]
          %v413 = vld [vmem:[%s2] sm:$0xff]
          %v414 = vld [vmem:[%s2 + $0x8] sm:$0xff]
          %v415 = vld [vmem:[%s2 + $0x10] sm:$0xff]
          %v416 = vld [vmem:[%s2 + $0x18] sm:$0xff]
          %418 = vset.pattern.permute.xlu0 0
          %419 = vperm.xlu0 %418, %v413
          %v420 = vpop.permute.xlu0 %419
          %423 = vset.pattern.permute.xlu0 0
          %424 = vperm.xlu0 %423, %v414
          %v425 = vpop.permute.xlu0 %424
          %428 = vset.pattern.permute.xlu0 0
          %429 = vperm.xlu0 %428, %v415
          %v430 = vpop.permute.xlu0 %429
          %433 = vset.pattern.permute.xlu0 0
          %434 = vperm.xlu0 %433, %v416
          %v435 = vpop.permute.xlu0 %434
          %vm437 = vcmask 261120
          %v439 = vsel %vm437, %v393, 0
          %v442 = vsel %vm437, %v394, 0
          %v445 = vsel %vm437, %v395, 0
          %v448 = vsel %vm437, %v396, 0
          %450 = vmatprep.subr.mxu0 0.0
          %451 = vmatpush1.msra.mxu0 0.0
          %452 = vmatprep.subr.mxu0 0.0
          %453 = vmatpush1.msra.mxu0 0.0
          %454 = vmatprep.subr.mxu0 0.0
          %455 = vmatpush1.msra.mxu0 0.0
          %456 = vmatprep.subr.mxu0 0.0
          %457 = vmatpush1.msra.mxu0 0.0
          %458 = vmatprep.subr.mxu0 0.0
          %459 = vmatpush1.msra.mxu0 0.0
          %460 = vmatprep.subr.mxu0 0.0
          %461 = vmatpush1.msra.mxu0 0.0
          %462 = vmatprep.subr.mxu0 0.0
          %463 = vmatpush1.msra.mxu0 0.0
          %464 = vmatprep.subr.mxu0 0.0
          %465 = vmatpush1.msra.mxu0 0.0
          %466 = vmatprep.subr.mxu0 0.0
          %467 = vmatpush1.msra.mxu0 0.0
          %468 = vmatprep.subr.mxu0 0.0
          %469 = vmatpush1.msra.mxu0 0.0
          %470 = vmatprep.subr.mxu0 0.0
          %471 = vmatpush1.msra.mxu0 0.0
          %472 = vmatprep.subr.mxu0 0.0
          %473 = vmatpush1.msra.mxu0 0.0
          %474 = vmatprep.subr.mxu0 %v410
          %475 = vmatpush1.msra.mxu0 %v409
          %476 = vmatprep.subr.mxu0 %v406
          %477 = vmatpush1.msra.mxu0 %v405
          %478 = vmatprep.subr.mxu0 %v402
          %479 = vmatpush1.msra.mxu0 %v401
          %480 = vmatprep.subr.mxu0 %v398
          %481 = vmatpush1.msra.mxu0 %v397
          %482 = vmatprep.subr.mxu0 0.0
          %483 = vmatpush2.msra.mxu0 0.0
          %484 = vmatprep.subr.mxu0 0.0
          %485 = vmatpush2.msra.mxu0 0.0
          %486 = vmatprep.subr.mxu0 0.0
          %487 = vmatpush2.msra.mxu0 0.0
          %488 = vmatprep.subr.mxu0 0.0
          %489 = vmatpush2.msra.mxu0 0.0
          %490 = vmatprep.subr.mxu0 0.0
          %491 = vmatpush2.msra.mxu0 0.0
          %492 = vmatprep.subr.mxu0 0.0
          %493 = vmatpush2.msra.mxu0 0.0
          %494 = vmatprep.subr.mxu0 0.0
          %495 = vmatpush2.msra.mxu0 0.0
          %496 = vmatprep.subr.mxu0 0.0
          %497 = vmatpush2.msra.mxu0 0.0
          %498 = vmatprep.subr.mxu0 0.0
          %499 = vmatpush2.msra.mxu0 0.0
          %500 = vmatprep.subr.mxu0 0.0
          %501 = vmatpush2.msra.mxu0 0.0
          %502 = vmatprep.subr.mxu0 0.0
          %503 = vmatpush2.msra.mxu0 0.0
          %504 = vmatprep.subr.mxu0 0.0
          %505 = vmatpush2.msra.mxu0 0.0
          %506 = vmatprep.subr.mxu0 0.0
          %507 = vmatpush2.msra.mxu0 0.0
          %508 = vmatprep.subr.mxu0 0.0
          %509 = vmatpush2.msra.mxu0 0.0
          %510 = vmatprep.subr.mxu0 0.0
          %511 = vmatpush2.msra.mxu0 0.0
          %512 = vmatprep.subr.mxu0 0.0
          %513 = vmatpush2.msra.mxu0 0.0
          %514 = vmatprep.mubr.f32.mxu0 0.0
          %515 = vmatmul.mubr.f32.gmra.mxu0 %v439
          %v516 = vpop.f32.mrf.mxu0
          %v517 = vadd.f32 %v420, %v516
          %v518 = vpop.f32.mrf.mxu0
          %v519 = vadd.f32 %v420, %v518
          %520 = vmatprep.mubr.f32.mxu0 0.0
          %521 = vmatmul.mubr.f32.gmra.mxu0 %v442
          %v522 = vpop.f32.mrf.mxu0
          %v523 = vadd.f32 %v425, %v522
          %v524 = vpop.f32.mrf.mxu0
          %v525 = vadd.f32 %v425, %v524
          %526 = vmatprep.mubr.f32.mxu0 0.0
          %527 = vmatmul.mubr.f32.gmra.mxu0 %v445
          %v528 = vpop.f32.mrf.mxu0
          %v529 = vadd.f32 %v430, %v528
          %v530 = vpop.f32.mrf.mxu0
          %v531 = vadd.f32 %v430, %v530
          %532 = vmatprep.mubr.f32.mxu0 0.0
          %533 = vmatmul.mubr.f32.gmra.mxu0 %v448
          %v534 = vpop.f32.mrf.mxu0
          %v535 = vadd.f32 %v435, %v534
          %v536 = vpop.f32.mrf.mxu0
          %v537 = vadd.f32 %v435, %v536
          %538 = vdwg.mxu0
          %539 = vmatprep.subr.mxu0 0.0
          %540 = vmatpush1.msra.mxu0 0.0
          %541 = vmatprep.subr.mxu0 0.0
          %542 = vmatpush1.msra.mxu0 0.0
          %543 = vmatprep.subr.mxu0 0.0
          %544 = vmatpush1.msra.mxu0 0.0
          %545 = vmatprep.subr.mxu0 0.0
          %546 = vmatpush1.msra.mxu0 0.0
          %547 = vmatprep.subr.mxu0 0.0
          %548 = vmatpush1.msra.mxu0 0.0
          %549 = vmatprep.subr.mxu0 0.0
          %550 = vmatpush1.msra.mxu0 0.0
          %551 = vmatprep.subr.mxu0 0.0
          %552 = vmatpush1.msra.mxu0 0.0
          %553 = vmatprep.subr.mxu0 0.0
          %554 = vmatpush1.msra.mxu0 0.0
          %555 = vmatprep.subr.mxu0 0.0
          %556 = vmatpush1.msra.mxu0 0.0
          %557 = vmatprep.subr.mxu0 0.0
          %558 = vmatpush1.msra.mxu0 0.0
          %559 = vmatprep.subr.mxu0 0.0
          %560 = vmatpush1.msra.mxu0 0.0
          %561 = vmatprep.subr.mxu0 0.0
          %562 = vmatpush1.msra.mxu0 0.0
          %563 = vmatprep.subr.mxu0 %v412
          %564 = vmatpush1.msra.mxu0 %v411
          %565 = vmatprep.subr.mxu0 %v408
          %566 = vmatpush1.msra.mxu0 %v407
          %567 = vmatprep.subr.mxu0 %v404
          %568 = vmatpush1.msra.mxu0 %v403
          %569 = vmatprep.subr.mxu0 %v400
          %570 = vmatpush1.msra.mxu0 %v399
          %571 = vmatprep.subr.mxu0 0.0
          %572 = vmatpush2.msra.mxu0 0.0
          %573 = vmatprep.subr.mxu0 0.0
          %574 = vmatpush2.msra.mxu0 0.0
          %575 = vmatprep.subr.mxu0 0.0
          %576 = vmatpush2.msra.mxu0 0.0
          %577 = vmatprep.subr.mxu0 0.0
          %578 = vmatpush2.msra.mxu0 0.0
          %579 = vmatprep.subr.mxu0 0.0
          %580 = vmatpush2.msra.mxu0 0.0
          %581 = vmatprep.subr.mxu0 0.0
          %582 = vmatpush2.msra.mxu0 0.0
          %583 = vmatprep.subr.mxu0 0.0
          %584 = vmatpush2.msra.mxu0 0.0
          %585 = vmatprep.subr.mxu0 0.0
          %586 = vmatpush2.msra.mxu0 0.0
          %587 = vmatprep.subr.mxu0 0.0
          %588 = vmatpush2.msra.mxu0 0.0
          %589 = vmatprep.subr.mxu0 0.0
          %590 = vmatpush2.msra.mxu0 0.0
          %591 = vmatprep.subr.mxu0 0.0
          %592 = vmatpush2.msra.mxu0 0.0
          %593 = vmatprep.subr.mxu0 0.0
          %594 = vmatpush2.msra.mxu0 0.0
          %595 = vmatprep.subr.mxu0 0.0
          %596 = vmatpush2.msra.mxu0 0.0
          %597 = vmatprep.subr.mxu0 0.0
          %598 = vmatpush2.msra.mxu0 0.0
          %599 = vmatprep.subr.mxu0 0.0
          %600 = vmatpush2.msra.mxu0 0.0
          %601 = vmatprep.subr.mxu0 0.0
          %602 = vmatpush2.msra.mxu0 0.0
          %603 = vmatprep.mubr.f32.mxu0 0.0
          %604 = vmatmul.mubr.f32.gmra.mxu0 %v439
          %v605 = vpop.f32.mrf.mxu0
          %v606 = vadd.f32 %v420, %v605
          %v607 = vpop.f32.mrf.mxu0
          %v608 = vadd.f32 %v420, %v607
          %609 = vmatprep.mubr.f32.mxu0 0.0
          %610 = vmatmul.mubr.f32.gmra.mxu0 %v442
          %v611 = vpop.f32.mrf.mxu0
          %v612 = vadd.f32 %v425, %v611
          %v613 = vpop.f32.mrf.mxu0
          %v614 = vadd.f32 %v425, %v613
          %615 = vmatprep.mubr.f32.mxu0 0.0
          %616 = vmatmul.mubr.f32.gmra.mxu0 %v445
          %v617 = vpop.f32.mrf.mxu0
          %v618 = vadd.f32 %v430, %v617
          %v619 = vpop.f32.mrf.mxu0
          %v620 = vadd.f32 %v430, %v619
          %621 = vmatprep.mubr.f32.mxu0 0.0
          %622 = vmatmul.mubr.f32.gmra.mxu0 %v448
          %v623 = vpop.f32.mrf.mxu0
          %v624 = vadd.f32 %v435, %v623
          %v625 = vpop.f32.mrf.mxu0
          %v626 = vadd.f32 %v435, %v625
          %627 = vdwg.mxu0
          %v628 = vmax.f32 %v517, 0.0
          %v629 = vmax.f32 %v519, 0.0
          %v630 = vmax.f32 %v606, 0.0
          %v631 = vmax.f32 %v608, 0.0
          %v632 = vmax.f32 %v523, 0.0
          %v633 = vmax.f32 %v525, 0.0
          %v634 = vmax.f32 %v612, 0.0
          %v635 = vmax.f32 %v614, 0.0
          %v636 = vmax.f32 %v529, 0.0
          %v637 = vmax.f32 %v531, 0.0
          %v638 = vmax.f32 %v618, 0.0
          %v639 = vmax.f32 %v620, 0.0
          %v640 = vmax.f32 %v535, 0.0
          %v641 = vmax.f32 %v537, 0.0
          %v642 = vmax.f32 %v624, 0.0
          %v643 = vmax.f32 %v626, 0.0
          %v644 = vld [vmem:[%s3] sm:$0xff]
          %v645 = vld [vmem:[%s4] sm:$0xff]
          %647 = vset.pattern.permute.xlu0 0
          %648 = vperm.xlu0 %647, %v645
          %v649 = vpop.permute.xlu0 %648
          %v652 = vsel %vm437, %v644, 0
          %654 = vmatprep.subr.mxu0 0.0
          %655 = vmatpush1.msra.mxu0 0.0
          %656 = vmatprep.subr.mxu0 0.0
          %657 = vmatpush1.msra.mxu0 0.0
          %658 = vmatprep.subr.mxu0 0.0
          %659 = vmatpush1.msra.mxu0 0.0
          %660 = vmatprep.subr.mxu0 0.0
          %661 = vmatpush1.msra.mxu0 0.0
          %662 = vmatprep.subr.mxu0 0.0
          %663 = vmatpush1.msra.mxu0 0.0
          %664 = vmatprep.subr.mxu0 0.0
          %665 = vmatpush1.msra.mxu0 0.0
          %666 = vmatprep.subr.mxu0 0.0
          %667 = vmatpush1.msra.mxu0 0.0
          %668 = vmatprep.subr.mxu0 0.0
          %669 = vmatpush1.msra.mxu0 0.0
          %670 = vmatprep.subr.mxu0 0.0
          %671 = vmatpush1.msra.mxu0 0.0
          %672 = vmatprep.subr.mxu0 0.0
          %673 = vmatpush1.msra.mxu0 0.0
          %674 = vmatprep.subr.mxu0 0.0
          %675 = vmatpush1.msra.mxu0 0.0
          %676 = vmatprep.subr.mxu0 0.0
          %677 = vmatpush1.msra.mxu0 0.0
          %678 = vmatprep.subr.mxu0 %v641
          %679 = vmatpush1.msra.mxu0 %v640
          %680 = vmatprep.subr.mxu0 %v637
          %681 = vmatpush1.msra.mxu0 %v636
          %682 = vmatprep.subr.mxu0 %v633
          %683 = vmatpush1.msra.mxu0 %v632
          %684 = vmatprep.subr.mxu0 %v629
          %685 = vmatpush1.msra.mxu0 %v628
          %686 = vmatprep.subr.mxu0 0.0
          %687 = vmatpush2.msra.mxu0 0.0
          %688 = vmatprep.subr.mxu0 0.0
          %689 = vmatpush2.msra.mxu0 0.0
          %690 = vmatprep.subr.mxu0 0.0
          %691 = vmatpush2.msra.mxu0 0.0
          %692 = vmatprep.subr.mxu0 0.0
          %693 = vmatpush2.msra.mxu0 0.0
          %694 = vmatprep.subr.mxu0 0.0
          %695 = vmatpush2.msra.mxu0 0.0
          %696 = vmatprep.subr.mxu0 0.0
          %697 = vmatpush2.msra.mxu0 0.0
          %698 = vmatprep.subr.mxu0 0.0
          %699 = vmatpush2.msra.mxu0 0.0
          %700 = vmatprep.subr.mxu0 0.0
          %701 = vmatpush2.msra.mxu0 0.0
          %702 = vmatprep.subr.mxu0 0.0
          %703 = vmatpush2.msra.mxu0 0.0
          %704 = vmatprep.subr.mxu0 0.0
          %705 = vmatpush2.msra.mxu0 0.0
          %706 = vmatprep.subr.mxu0 0.0
          %707 = vmatpush2.msra.mxu0 0.0
          %708 = vmatprep.subr.mxu0 0.0
          %709 = vmatpush2.msra.mxu0 0.0
          %710 = vmatprep.subr.mxu0 0.0
          %711 = vmatpush2.msra.mxu0 0.0
          %712 = vmatprep.subr.mxu0 0.0
          %713 = vmatpush2.msra.mxu0 0.0
          %714 = vmatprep.subr.mxu0 0.0
          %715 = vmatpush2.msra.mxu0 0.0
          %716 = vmatprep.subr.mxu0 0.0
          %717 = vmatpush2.msra.mxu0 0.0
          %718 = vmatprep.mubr.f32.mxu0 0.0
          %719 = vmatmul.mubr.f32.gmra.mxu0 %v652
          %v720 = vpop.f32.mrf.mxu0
          %v721 = vadd.f32 %v649, %v720
          %v722 = vpop.f32.mrf.mxu0
          %v723 = vadd.f32 %v649, %v722
          %724 = vdwg.mxu0
          %725 = vmatprep.subr.mxu0 0.0
          %726 = vmatpush1.msra.mxu0 0.0
          %727 = vmatprep.subr.mxu0 0.0
          %728 = vmatpush1.msra.mxu0 0.0
          %729 = vmatprep.subr.mxu0 0.0
          %730 = vmatpush1.msra.mxu0 0.0
          %731 = vmatprep.subr.mxu0 0.0
          %732 = vmatpush1.msra.mxu0 0.0
          %733 = vmatprep.subr.mxu0 0.0
          %734 = vmatpush1.msra.mxu0 0.0
          %735 = vmatprep.subr.mxu0 0.0
          %736 = vmatpush1.msra.mxu0 0.0
          %737 = vmatprep.subr.mxu0 0.0
          %738 = vmatpush1.msra.mxu0 0.0
          %739 = vmatprep.subr.mxu0 0.0
          %740 = vmatpush1.msra.mxu0 0.0
          %741 = vmatprep.subr.mxu0 0.0
          %742 = vmatpush1.msra.mxu0 0.0
          %743 = vmatprep.subr.mxu0 0.0
          %744 = vmatpush1.msra.mxu0 0.0
          %745 = vmatprep.subr.mxu0 0.0
          %746 = vmatpush1.msra.mxu0 0.0
          %747 = vmatprep.subr.mxu0 0.0
          %748 = vmatpush1.msra.mxu0 0.0
          %749 = vmatprep.subr.mxu0 %v643
          %750 = vmatpush1.msra.mxu0 %v642
          %751 = vmatprep.subr.mxu0 %v639
          %752 = vmatpush1.msra.mxu0 %v638
          %753 = vmatprep.subr.mxu0 %v635
          %754 = vmatpush1.msra.mxu0 %v634
          %755 = vmatprep.subr.mxu0 %v631
          %756 = vmatpush1.msra.mxu0 %v630
          %757 = vmatprep.subr.mxu0 0.0
          %758 = vmatpush2.msra.mxu0 0.0
          %759 = vmatprep.subr.mxu0 0.0
          %760 = vmatpush2.msra.mxu0 0.0
          %761 = vmatprep.subr.mxu0 0.0
          %762 = vmatpush2.msra.mxu0 0.0
          %763 = vmatprep.subr.mxu0 0.0
          %764 = vmatpush2.msra.mxu0 0.0
          %765 = vmatprep.subr.mxu0 0.0
          %766 = vmatpush2.msra.mxu0 0.0
          %767 = vmatprep.subr.mxu0 0.0
          %768 = vmatpush2.msra.mxu0 0.0
          %769 = vmatprep.subr.mxu0 0.0
          %770 = vmatpush2.msra.mxu0 0.0
          %771 = vmatprep.subr.mxu0 0.0
          %772 = vmatpush2.msra.mxu0 0.0
          %773 = vmatprep.subr.mxu0 0.0
          %774 = vmatpush2.msra.mxu0 0.0
          %775 = vmatprep.subr.mxu0 0.0
          %776 = vmatpush2.msra.mxu0 0.0
          %777 = vmatprep.subr.mxu0 0.0
          %778 = vmatpush2.msra.mxu0 0.0
          %779 = vmatprep.subr.mxu0 0.0
          %780 = vmatpush2.msra.mxu0 0.0
          %781 = vmatprep.subr.mxu0 0.0
          %782 = vmatpush2.msra.mxu0 0.0
          %783 = vmatprep.subr.mxu0 0.0
          %784 = vmatpush2.msra.mxu0 0.0
          %785 = vmatprep.subr.mxu0 0.0
          %786 = vmatpush2.msra.mxu0 0.0
          %787 = vmatprep.subr.mxu0 0.0
          %788 = vmatpush2.msra.mxu0 0.0
          %789 = vmatprep.mubr.f32.mxu0 0.0
          %790 = vmatmul.mubr.f32.gmra.mxu0 %v652
          %v791 = vpop.f32.mrf.mxu0
          %v792 = vadd.f32 %v649, %v791
          %v793 = vpop.f32.mrf.mxu0
          %v794 = vadd.f32 %v649, %v793
          %795 = vdwg.mxu0
          %s796 = sshra.s32 %s388, 7
          %s797 = sand.u32 %s388, 127
          %s798 = smul.addr %s796, 8
          %s799 = scalar_lea.vmem [#allocation2], %s798
          %800 = vst [vmem:[%s799] sm:$0xff] %v721
          %801 = vst [vmem:[%s799 + $0x8] sm:$0xff] %v723
          %802 = vst [vmem:[%s799 + $0x10] sm:$0xff] %v792
          %803 = vst [vmem:[%s799 + $0x18] sm:$0xff] %v794
          %s804 = sld [smem:[#allocation10 + $0x7]]
          %v805 = vstv %s804
          %v806 = vmul.f32 %v805, %v721
          %v807 = vmul.f32 %v805, %v723
          %v808 = vmul.f32 %v805, %v792
          %v809 = vmul.f32 %v805, %v794
          %s810 = smul.addr %s796, 8
          %s811 = scalar_lea.vmem [#allocation3], %s810
          %812 = vst [vmem:[%s811] sm:$0xff] %v806
          %813 = vst [vmem:[%s811 + $0x8] sm:$0xff] %v807
          %814 = vst [vmem:[%s811 + $0x10] sm:$0xff] %v808
          %815 = vst [vmem:[%s811 + $0x18] sm:$0xff] %v809
        $region64: #{tpu_custom_call.1} parent=47 // pred_fallthru
          _
        %p816 = scmp.lt.s32.totalorder %s32, 0
        %s817 = ssub.s32 0, %s32
        %s818 = scalar_select %p816, %s817, %s32
        %s819 = sand.u32 %s818, 1
        %s820 = ssub.s32 0, %s819
        %s821 = scalar_select %p816, %s820, %s819
        %p822 = scmp.eq.s32.totalorder %s821, 1
        %p823 = scmp.gt.s32.totalorder %s32, 0
        %p824 = pnand %p823, %p822
        %p825 = pneg %p824
        // Predicated region
        $region65: #{tpu_custom_call.1} parent=47 // pred_check
          _
        $region66: #{tpu_custom_call.1} parent=47 // pred_check_branch
          %827 = sbr.rel (%p824) target = $region68
        $region67: #{tpu_custom_call.1} parent=47 // pred_region
          %v828 = vld [vmem:[%s338] sm:$0xff]
          %v829 = vld [vmem:[%s338 + $0x8] sm:$0xff]
          %v830 = vld [vmem:[%s338 + $0x10] sm:$0xff]
          %v831 = vld [vmem:[%s338 + $0x18] sm:$0xff]
          %v832 = vld [vmem:[%s338 + $0x20] sm:$0xff]
          %v833 = vld [vmem:[%s338 + $0x28] sm:$0xff]
          %v834 = vld [vmem:[%s338 + $0x30] sm:$0xff]
          %v835 = vld [vmem:[%s338 + $0x38] sm:$0xff]
          %v836 = vld [vmem:[%s338 + $0x40] sm:$0xff]
          %v837 = vld [vmem:[%s338 + $0x48] sm:$0xff]
          %v838 = vld [vmem:[%s338 + $0x50] sm:$0xff]
          %v839 = vld [vmem:[%s338 + $0x58] sm:$0xff]
          %v840 = vld [vmem:[%s338 + $0x60] sm:$0xff]
          %v841 = vld [vmem:[%s338 + $0x68] sm:$0xff]
          %v842 = vld [vmem:[%s338 + $0x70] sm:$0xff]
          %v843 = vld [vmem:[%s338 + $0x78] sm:$0xff]
          %v844 = vld [vmem:[%s338 + $0x80] sm:$0xff]
          %v845 = vld [vmem:[%s338 + $0x88] sm:$0xff]
          %v846 = vld [vmem:[%s338 + $0x90] sm:$0xff]
          %v847 = vld [vmem:[%s338 + $0x98] sm:$0xff]
          %v848 = vld [vmem:[%s338 + $0xa0] sm:$0xff]
          %v849 = vld [vmem:[%s338 + $0xa8] sm:$0xff]
          %v850 = vld [vmem:[%s338 + $0xb0] sm:$0xff]
          %v851 = vld [vmem:[%s338 + $0xb8] sm:$0xff]
          %v852 = vld [vmem:[%s338 + $0xc0] sm:$0xff]
          %v853 = vld [vmem:[%s338 + $0xc8] sm:$0xff]
          %v854 = vld [vmem:[%s338 + $0xd0] sm:$0xff]
          %v855 = vld [vmem:[%s338 + $0xd8] sm:$0xff]
          %v856 = vld [vmem:[%s338 + $0xe0] sm:$0xff]
          %v857 = vld [vmem:[%s338 + $0xe8] sm:$0xff]
          %v858 = vld [vmem:[%s338 + $0xf0] sm:$0xff]
          %v859 = vld [vmem:[%s338 + $0xf8] sm:$0xff]
          %v860 = vld [vmem:[%s338 + $0x100] sm:$0xff]
          %v861 = vld [vmem:[%s338 + $0x108] sm:$0xff]
          %v862 = vld [vmem:[%s338 + $0x110] sm:$0xff]
          %v863 = vld [vmem:[%s338 + $0x118] sm:$0xff]
          %v864 = vld [vmem:[%s338 + $0x120] sm:$0xff]
          %v865 = vld [vmem:[%s338 + $0x128] sm:$0xff]
          %v866 = vld [vmem:[%s338 + $0x130] sm:$0xff]
          %v867 = vld [vmem:[%s338 + $0x138] sm:$0xff]
          %v868 = vld [vmem:[%s338 + $0x140] sm:$0xff]
          %v869 = vld [vmem:[%s338 + $0x148] sm:$0xff]
          %v870 = vld [vmem:[%s338 + $0x150] sm:$0xff]
          %v871 = vld [vmem:[%s338 + $0x158] sm:$0xff]
          %v872 = vld [vmem:[%s338 + $0x160] sm:$0xff]
          %v873 = vld [vmem:[%s338 + $0x168] sm:$0xff]
          %v874 = vld [vmem:[%s338 + $0x170] sm:$0xff]
          %v875 = vld [vmem:[%s338 + $0x178] sm:$0xff]
          %v876 = vld [vmem:[%s338 + $0x180] sm:$0xff]
          %v877 = vld [vmem:[%s338 + $0x188] sm:$0xff]
          %v878 = vld [vmem:[%s338 + $0x190] sm:$0xff]
          %v879 = vld [vmem:[%s338 + $0x198] sm:$0xff]
          %v880 = vld [vmem:[%s338 + $0x1a0] sm:$0xff]
          %v881 = vld [vmem:[%s338 + $0x1a8] sm:$0xff]
          %v882 = vld [vmem:[%s338 + $0x1b0] sm:$0xff]
          %v883 = vld [vmem:[%s338 + $0x1b8] sm:$0xff]
          %v884 = vld [vmem:[%s338 + $0x1c0] sm:$0xff]
          %v885 = vld [vmem:[%s338 + $0x1c8] sm:$0xff]
          %v886 = vld [vmem:[%s338 + $0x1d0] sm:$0xff]
          %v887 = vld [vmem:[%s338 + $0x1d8] sm:$0xff]
          %v888 = vld [vmem:[%s338 + $0x1e0] sm:$0xff]
          %v889 = vld [vmem:[%s338 + $0x1e8] sm:$0xff]
          %v890 = vld [vmem:[%s338 + $0x1f0] sm:$0xff]
          %v891 = vld [vmem:[%s338 + $0x1f8] sm:$0xff]
          %v892 = vld [vmem:[%s338 + $0x200] sm:$0xff]
          %v893 = vld [vmem:[%s338 + $0x208] sm:$0xff]
          %v894 = vld [vmem:[%s338 + $0x210] sm:$0xff]
          %v895 = vld [vmem:[%s338 + $0x218] sm:$0xff]
          %v896 = vld [vmem:[%s338 + $0x220] sm:$0xff]
          %v897 = vld [vmem:[%s338 + $0x228] sm:$0xff]
          %v898 = vld [vmem:[%s338 + $0x230] sm:$0xff]
          %v899 = vld [vmem:[%s338 + $0x238] sm:$0xff]
          %v900 = vld [vmem:[%s338 + $0x240] sm:$0xff]
          %v901 = vld [vmem:[%s338 + $0x248] sm:$0xff]
          %v902 = vld [vmem:[%s338 + $0x250] sm:$0xff]
          %v903 = vld [vmem:[%s338 + $0x258] sm:$0xff]
          %v904 = vld [vmem:[%s338 + $0x260] sm:$0xff]
          %v905 = vld [vmem:[%s338 + $0x268] sm:$0xff]
          %v906 = vld [vmem:[%s338 + $0x270] sm:$0xff]
          %v907 = vld [vmem:[%s338 + $0x278] sm:$0xff]
          %v908 = vld [vmem:[%s338 + $0x280] sm:$0xff]
          %v909 = vld [vmem:[%s338 + $0x288] sm:$0xff]
          %v910 = vld [vmem:[%s338 + $0x290] sm:$0xff]
          %v911 = vld [vmem:[%s338 + $0x298] sm:$0xff]
          %v912 = vld [vmem:[%s338 + $0x2a0] sm:$0xff]
          %v913 = vld [vmem:[%s338 + $0x2a8] sm:$0xff]
          %v914 = vld [vmem:[%s338 + $0x2b0] sm:$0xff]
          %v915 = vld [vmem:[%s338 + $0x2b8] sm:$0xff]
          %v916 = vld [vmem:[%s338 + $0x2c0] sm:$0xff]
          %v917 = vld [vmem:[%s338 + $0x2c8] sm:$0xff]
          %v918 = vld [vmem:[%s338 + $0x2d0] sm:$0xff]
          %v919 = vld [vmem:[%s338 + $0x2d8] sm:$0xff]
          %v920 = vld [vmem:[%s338 + $0x2e0] sm:$0xff]
          %v921 = vld [vmem:[%s338 + $0x2e8] sm:$0xff]
          %v922 = vld [vmem:[%s338 + $0x2f0] sm:$0xff]
          %v923 = vld [vmem:[%s338 + $0x2f8] sm:$0xff]
          %v924 = vld [vmem:[%s338 + $0x300] sm:$0xff]
          %v925 = vld [vmem:[%s338 + $0x308] sm:$0xff]
          %v926 = vld [vmem:[%s338 + $0x310] sm:$0xff]
          %v927 = vld [vmem:[%s338 + $0x318] sm:$0xff]
          %v928 = vld [vmem:[%s338 + $0x320] sm:$0xff]
          %v929 = vld [vmem:[%s338 + $0x328] sm:$0xff]
          %v930 = vld [vmem:[%s338 + $0x330] sm:$0xff]
          %v931 = vld [vmem:[%s338 + $0x338] sm:$0xff]
          %v932 = vld [vmem:[%s338 + $0x340] sm:$0xff]
          %v933 = vld [vmem:[%s338 + $0x348] sm:$0xff]
          %v934 = vld [vmem:[%s338 + $0x350] sm:$0xff]
          %v935 = vld [vmem:[%s338 + $0x358] sm:$0xff]
          %v936 = vld [vmem:[%s338 + $0x360] sm:$0xff]
          %v937 = vld [vmem:[%s338 + $0x368] sm:$0xff]
          %v938 = vld [vmem:[%s338 + $0x370] sm:$0xff]
          %v939 = vld [vmem:[%s338 + $0x378] sm:$0xff]
          %v940 = vld [vmem:[%s338 + $0x380] sm:$0xff]
          %v941 = vld [vmem:[%s338 + $0x388] sm:$0xff]
          %v942 = vld [vmem:[%s338 + $0x390] sm:$0xff]
          %v943 = vld [vmem:[%s338 + $0x398] sm:$0xff]
          %v944 = vld [vmem:[%s338 + $0x3a0] sm:$0xff]
          %v945 = vld [vmem:[%s338 + $0x3a8] sm:$0xff]
          %v946 = vld [vmem:[%s338 + $0x3b0] sm:$0xff]
          %v947 = vld [vmem:[%s338 + $0x3b8] sm:$0xff]
          %v948 = vld [vmem:[%s338 + $0x3c0] sm:$0xff]
          %v949 = vld [vmem:[%s338 + $0x3c8] sm:$0xff]
          %v950 = vld [vmem:[%s338 + $0x3d0] sm:$0xff]
          %v951 = vld [vmem:[%s338 + $0x3d8] sm:$0xff]
          %v952 = vld [vmem:[%s338 + $0x3e0] sm:$0xff]
          %v953 = vld [vmem:[%s338 + $0x3e8] sm:$0xff]
          %v954 = vld [vmem:[%s338 + $0x3f0] sm:$0xff]
          %v955 = vld [vmem:[%s338 + $0x3f8] sm:$0xff]
          %v956 = vld [vmem:[#allocation2] sm:$0xff]
          %v957 = vld [vmem:[#allocation2 + $0x8] sm:$0xff]
          %v958 = vld [vmem:[#allocation2 + $0x10] sm:$0xff]
          %v959 = vld [vmem:[#allocation2 + $0x18] sm:$0xff]
          %v960 = vpack.c.bf16 %v956, %v956
          %v961 = vpack.c.bf16 %v957, %v957
          %v962 = vpack.c.bf16 %v958, %v958
          %v963 = vpack.c.bf16 %v959, %v959
          %s964 = ssub.s32 7, %s32
          %s965 = sld [smem:[#allocation10 + %s964]]
          %s966 = sshra.s32 %s388, 7
          %s967 = sand.u32 %s388, 127
          %s968 = smul.addr %s966, 8
          %s969 = scalar_lea.vmem [#allocation3], %s968
          %v970 = vld [vmem:[%s969] sm:$0xff]
          %v971 = vld [vmem:[%s969 + $0x8] sm:$0xff]
          %v972 = vld [vmem:[%s969 + $0x10] sm:$0xff]
          %v973 = vld [vmem:[%s969 + $0x18] sm:$0xff]
          %v974 = vstv %s965
          %v975 = vmul.f32 %v974, %v970
          %v976 = vmul.f32 %v974, %v971
          %v977 = vmul.f32 %v974, %v972
          %v978 = vmul.f32 %v974, %v973
          %v1107 = vunpack.c.l.b16 %v828
          %v1108 = vunpack.c.h.b16 %v828
          %v1109 = vunpack.c.l.b16 %v829
          %v1110 = vunpack.c.h.b16 %v829
          %v1111 = vunpack.c.l.b16 %v830
          %v1112 = vunpack.c.h.b16 %v830
          %v1113 = vunpack.c.l.b16 %v831
          %v1114 = vunpack.c.h.b16 %v831
          %v1115 = vunpack.c.l.b16 %v832
          %v1116 = vunpack.c.h.b16 %v832
          %v1117 = vunpack.c.l.b16 %v833
          %v1118 = vunpack.c.h.b16 %v833
          %v1119 = vunpack.c.l.b16 %v834
          %v1120 = vunpack.c.h.b16 %v834
          %v1121 = vunpack.c.l.b16 %v835
          %v1122 = vunpack.c.h.b16 %v835
          %v1123 = vunpack.c.l.b16 %v836
          %v1124 = vunpack.c.h.b16 %v836
          %v1125 = vunpack.c.l.b16 %v837
          %v1126 = vunpack.c.h.b16 %v837
          %v1127 = vunpack.c.l.b16 %v838
          %v1128 = vunpack.c.h.b16 %v838
          %v1129 = vunpack.c.l.b16 %v839
          %v1130 = vunpack.c.h.b16 %v839
          %v1131 = vunpack.c.l.b16 %v840
          %v1132 = vunpack.c.h.b16 %v840
          %v1133 = vunpack.c.l.b16 %v841
          %v1134 = vunpack.c.h.b16 %v841
          %v1135 = vunpack.c.l.b16 %v842
          %v1136 = vunpack.c.h.b16 %v842
          %v1137 = vunpack.c.l.b16 %v843
          %v1138 = vunpack.c.h.b16 %v843
          %v1139 = vunpack.c.l.b16 %v844
          %v1140 = vunpack.c.h.b16 %v844
          %v1141 = vunpack.c.l.b16 %v845
          %v1142 = vunpack.c.h.b16 %v845
          %v1143 = vunpack.c.l.b16 %v846
          %v1144 = vunpack.c.h.b16 %v846
          %v1145 = vunpack.c.l.b16 %v847
          %v1146 = vunpack.c.h.b16 %v847
          %v1147 = vunpack.c.l.b16 %v848
          %v1148 = vunpack.c.h.b16 %v848
          %v1149 = vunpack.c.l.b16 %v849
          %v1150 = vunpack.c.h.b16 %v849
          %v1151 = vunpack.c.l.b16 %v850
          %v1152 = vunpack.c.h.b16 %v850
          %v1153 = vunpack.c.l.b16 %v851
          %v1154 = vunpack.c.h.b16 %v851
          %v1155 = vunpack.c.l.b16 %v852
          %v1156 = vunpack.c.h.b16 %v852
          %v1157 = vunpack.c.l.b16 %v853
          %v1158 = vunpack.c.h.b16 %v853
          %v1159 = vunpack.c.l.b16 %v854
          %v1160 = vunpack.c.h.b16 %v854
          %v1161 = vunpack.c.l.b16 %v855
          %v1162 = vunpack.c.h.b16 %v855
          %v1163 = vunpack.c.l.b16 %v856
          %v1164 = vunpack.c.h.b16 %v856
          %v1165 = vunpack.c.l.b16 %v857
          %v1166 = vunpack.c.h.b16 %v857
          %v1167 = vunpack.c.l.b16 %v858
          %v1168 = vunpack.c.h.b16 %v858
          %v1169 = vunpack.c.l.b16 %v859
          %v1170 = vunpack.c.h.b16 %v859
          %v1171 = vunpack.c.l.b16 %v860
          %v1172 = vunpack.c.h.b16 %v860
          %v1173 = vunpack.c.l.b16 %v861
          %v1174 = vunpack.c.h.b16 %v861
          %v1175 = vunpack.c.l.b16 %v862
          %v1176 = vunpack.c.h.b16 %v862
          %v1177 = vunpack.c.l.b16 %v863
          %v1178 = vunpack.c.h.b16 %v863
          %v1179 = vunpack.c.l.b16 %v864
          %v1180 = vunpack.c.h.b16 %v864
          %v1181 = vunpack.c.l.b16 %v865
          %v1182 = vunpack.c.h.b16 %v865
          %v1183 = vunpack.c.l.b16 %v866
          %v1184 = vunpack.c.h.b16 %v866
          %v1185 = vunpack.c.l.b16 %v867
          %v1186 = vunpack.c.h.b16 %v867
          %v1187 = vunpack.c.l.b16 %v868
          %v1188 = vunpack.c.h.b16 %v868
          %v1189 = vunpack.c.l.b16 %v869
          %v1190 = vunpack.c.h.b16 %v869
          %v1191 = vunpack.c.l.b16 %v870
          %v1192 = vunpack.c.h.b16 %v870
          %v1193 = vunpack.c.l.b16 %v871
          %v1194 = vunpack.c.h.b16 %v871
          %v1195 = vunpack.c.l.b16 %v872
          %v1196 = vunpack.c.h.b16 %v872
          %v1197 = vunpack.c.l.b16 %v873
          %v1198 = vunpack.c.h.b16 %v873
          %v1199 = vunpack.c.l.b16 %v874
          %v1200 = vunpack.c.h.b16 %v874
          %v1201 = vunpack.c.l.b16 %v875
          %v1202 = vunpack.c.h.b16 %v875
          %v1203 = vunpack.c.l.b16 %v876
          %v1204 = vunpack.c.h.b16 %v876
          %v1205 = vunpack.c.l.b16 %v877
          %v1206 = vunpack.c.h.b16 %v877
          %v1207 = vunpack.c.l.b16 %v878
          %v1208 = vunpack.c.h.b16 %v878
          %v1209 = vunpack.c.l.b16 %v879
          %v1210 = vunpack.c.h.b16 %v879
          %v1211 = vunpack.c.l.b16 %v880
          %v1212 = vunpack.c.h.b16 %v880
          %v1213 = vunpack.c.l.b16 %v881
          %v1214 = vunpack.c.h.b16 %v881
          %v1215 = vunpack.c.l.b16 %v882
          %v1216 = vunpack.c.h.b16 %v882
          %v1217 = vunpack.c.l.b16 %v883
          %v1218 = vunpack.c.h.b16 %v883
          %v1219 = vunpack.c.l.b16 %v884
          %v1220 = vunpack.c.h.b16 %v884
          %v1221 = vunpack.c.l.b16 %v885
          %v1222 = vunpack.c.h.b16 %v885
          %v1223 = vunpack.c.l.b16 %v886
          %v1224 = vunpack.c.h.b16 %v886
          %v1225 = vunpack.c.l.b16 %v887
          %v1226 = vunpack.c.h.b16 %v887
          %v1227 = vunpack.c.l.b16 %v888
          %v1228 = vunpack.c.h.b16 %v888
          %v1229 = vunpack.c.l.b16 %v889
          %v1230 = vunpack.c.h.b16 %v889
          %v1231 = vunpack.c.l.b16 %v890
          %v1232 = vunpack.c.h.b16 %v890
          %v1233 = vunpack.c.l.b16 %v891
          %v1234 = vunpack.c.h.b16 %v891
          %v1235 = vunpack.c.l.b16 %v892
          %v1236 = vunpack.c.h.b16 %v892
          %v1237 = vunpack.c.l.b16 %v893
          %v1238 = vunpack.c.h.b16 %v893
          %v1239 = vunpack.c.l.b16 %v894
          %v1240 = vunpack.c.h.b16 %v894
          %v1241 = vunpack.c.l.b16 %v895
          %v1242 = vunpack.c.h.b16 %v895
          %v1243 = vunpack.c.l.b16 %v896
          %v1244 = vunpack.c.h.b16 %v896
          %v1245 = vunpack.c.l.b16 %v897
          %v1246 = vunpack.c.h.b16 %v897
          %v1247 = vunpack.c.l.b16 %v898
          %v1248 = vunpack.c.h.b16 %v898
          %v1249 = vunpack.c.l.b16 %v899
          %v1250 = vunpack.c.h.b16 %v899
          %v1251 = vunpack.c.l.b16 %v900
          %v1252 = vunpack.c.h.b16 %v900
          %v1253 = vunpack.c.l.b16 %v901
          %v1254 = vunpack.c.h.b16 %v901
          %v1255 = vunpack.c.l.b16 %v902
          %v1256 = vunpack.c.h.b16 %v902
          %v1257 = vunpack.c.l.b16 %v903
          %v1258 = vunpack.c.h.b16 %v903
          %v1259 = vunpack.c.l.b16 %v904
          %v1260 = vunpack.c.h.b16 %v904
          %v1261 = vunpack.c.l.b16 %v905
          %v1262 = vunpack.c.h.b16 %v905
          %v1263 = vunpack.c.l.b16 %v906
          %v1264 = vunpack.c.h.b16 %v906
          %v1265 = vunpack.c.l.b16 %v907
          %v1266 = vunpack.c.h.b16 %v907
          %v1267 = vunpack.c.l.b16 %v908
          %v1268 = vunpack.c.h.b16 %v908
          %v1269 = vunpack.c.l.b16 %v909
          %v1270 = vunpack.c.h.b16 %v909
          %v1271 = vunpack.c.l.b16 %v910
          %v1272 = vunpack.c.h.b16 %v910
          %v1273 = vunpack.c.l.b16 %v911
          %v1274 = vunpack.c.h.b16 %v911
          %v1275 = vunpack.c.l.b16 %v912
          %v1276 = vunpack.c.h.b16 %v912
          %v1277 = vunpack.c.l.b16 %v913
          %v1278 = vunpack.c.h.b16 %v913
          %v1279 = vunpack.c.l.b16 %v914
          %v1280 = vunpack.c.h.b16 %v914
          %v1281 = vunpack.c.l.b16 %v915
          %v1282 = vunpack.c.h.b16 %v915
          %v1283 = vunpack.c.l.b16 %v916
          %v1284 = vunpack.c.h.b16 %v916
          %v1285 = vunpack.c.l.b16 %v917
          %v1286 = vunpack.c.h.b16 %v917
          %v1287 = vunpack.c.l.b16 %v918
          %v1288 = vunpack.c.h.b16 %v918
          %v1289 = vunpack.c.l.b16 %v919
          %v1290 = vunpack.c.h.b16 %v919
          %v1291 = vunpack.c.l.b16 %v920
          %v1292 = vunpack.c.h.b16 %v920
          %v1293 = vunpack.c.l.b16 %v921
          %v1294 = vunpack.c.h.b16 %v921
          %v1295 = vunpack.c.l.b16 %v922
          %v1296 = vunpack.c.h.b16 %v922
          %v1297 = vunpack.c.l.b16 %v923
          %v1298 = vunpack.c.h.b16 %v923
          %v1299 = vunpack.c.l.b16 %v924
          %v1300 = vunpack.c.h.b16 %v924
          %v1301 = vunpack.c.l.b16 %v925
          %v1302 = vunpack.c.h.b16 %v925
          %v1303 = vunpack.c.l.b16 %v926
          %v1304 = vunpack.c.h.b16 %v926
          %v1305 = vunpack.c.l.b16 %v927
          %v1306 = vunpack.c.h.b16 %v927
          %v1307 = vunpack.c.l.b16 %v928
          %v1308 = vunpack.c.h.b16 %v928
          %v1309 = vunpack.c.l.b16 %v929
          %v1310 = vunpack.c.h.b16 %v929
          %v1311 = vunpack.c.l.b16 %v930
          %v1312 = vunpack.c.h.b16 %v930
          %v1313 = vunpack.c.l.b16 %v931
          %v1314 = vunpack.c.h.b16 %v931
          %v1315 = vunpack.c.l.b16 %v932
          %v1316 = vunpack.c.h.b16 %v932
          %v1317 = vunpack.c.l.b16 %v933
          %v1318 = vunpack.c.h.b16 %v933
          %v1319 = vunpack.c.l.b16 %v934
          %v1320 = vunpack.c.h.b16 %v934
          %v1321 = vunpack.c.l.b16 %v935
          %v1322 = vunpack.c.h.b16 %v935
          %v1323 = vunpack.c.l.b16 %v936
          %v1324 = vunpack.c.h.b16 %v936
          %v1325 = vunpack.c.l.b16 %v937
          %v1326 = vunpack.c.h.b16 %v937
          %v1327 = vunpack.c.l.b16 %v938
          %v1328 = vunpack.c.h.b16 %v938
          %v1329 = vunpack.c.l.b16 %v939
          %v1330 = vunpack.c.h.b16 %v939
          %v1331 = vunpack.c.l.b16 %v940
          %v1332 = vunpack.c.h.b16 %v940
          %v1333 = vunpack.c.l.b16 %v941
          %v1334 = vunpack.c.h.b16 %v941
          %v1335 = vunpack.c.l.b16 %v942
          %v1336 = vunpack.c.h.b16 %v942
          %v1337 = vunpack.c.l.b16 %v943
          %v1338 = vunpack.c.h.b16 %v943
          %v1339 = vunpack.c.l.b16 %v944
          %v1340 = vunpack.c.h.b16 %v944
          %v1341 = vunpack.c.l.b16 %v945
          %v1342 = vunpack.c.h.b16 %v945
          %v1343 = vunpack.c.l.b16 %v946
          %v1344 = vunpack.c.h.b16 %v946
          %v1345 = vunpack.c.l.b16 %v947
          %v1346 = vunpack.c.h.b16 %v947
          %v1347 = vunpack.c.l.b16 %v948
          %v1348 = vunpack.c.h.b16 %v948
          %v1349 = vunpack.c.l.b16 %v949
          %v1350 = vunpack.c.h.b16 %v949
          %v1351 = vunpack.c.l.b16 %v950
          %v1352 = vunpack.c.h.b16 %v950
          %v1353 = vunpack.c.l.b16 %v951
          %v1354 = vunpack.c.h.b16 %v951
          %v1355 = vunpack.c.l.b16 %v952
          %v1356 = vunpack.c.h.b16 %v952
          %v1357 = vunpack.c.l.b16 %v953
          %v1358 = vunpack.c.h.b16 %v953
          %v1359 = vunpack.c.l.b16 %v954
          %v1360 = vunpack.c.h.b16 %v954
          %v1361 = vunpack.c.l.b16 %v955
          %v1362 = vunpack.c.h.b16 %v955
          %v1363 = vpack.c.b16 %v1111, %v1107
          %v1364 = vpack.c.b16 %v1112, %v1108
          %v1365 = vpack.c.b16 %v1113, %v1109
          %v1366 = vpack.c.b16 %v1114, %v1110
          %v1367 = vpack.c.b16 %v1119, %v1115
          %v1368 = vpack.c.b16 %v1120, %v1116
          %v1369 = vpack.c.b16 %v1121, %v1117
          %v1370 = vpack.c.b16 %v1122, %v1118
          %v1371 = vpack.c.b16 %v1127, %v1123
          %v1372 = vpack.c.b16 %v1128, %v1124
          %v1373 = vpack.c.b16 %v1129, %v1125
          %v1374 = vpack.c.b16 %v1130, %v1126
          %v1375 = vpack.c.b16 %v1135, %v1131
          %v1376 = vpack.c.b16 %v1136, %v1132
          %v1377 = vpack.c.b16 %v1137, %v1133
          %v1378 = vpack.c.b16 %v1138, %v1134
          %v1379 = vpack.c.b16 %v1143, %v1139
          %v1380 = vpack.c.b16 %v1144, %v1140
          %v1381 = vpack.c.b16 %v1145, %v1141
          %v1382 = vpack.c.b16 %v1146, %v1142
          %v1383 = vpack.c.b16 %v1151, %v1147
          %v1384 = vpack.c.b16 %v1152, %v1148
          %v1385 = vpack.c.b16 %v1153, %v1149
          %v1386 = vpack.c.b16 %v1154, %v1150
          %v1387 = vpack.c.b16 %v1159, %v1155
          %v1388 = vpack.c.b16 %v1160, %v1156
          %v1389 = vpack.c.b16 %v1161, %v1157
          %v1390 = vpack.c.b16 %v1162, %v1158
          %v1391 = vpack.c.b16 %v1167, %v1163
          %v1392 = vpack.c.b16 %v1168, %v1164
          %v1393 = vpack.c.b16 %v1169, %v1165
          %v1394 = vpack.c.b16 %v1170, %v1166
          %v1395 = vpack.c.b16 %v1175, %v1171
          %v1396 = vpack.c.b16 %v1176, %v1172
          %v1397 = vpack.c.b16 %v1177, %v1173
          %v1398 = vpack.c.b16 %v1178, %v1174
          %v1399 = vpack.c.b16 %v1183, %v1179
          %v1400 = vpack.c.b16 %v1184, %v1180
          %v1401 = vpack.c.b16 %v1185, %v1181
          %v1402 = vpack.c.b16 %v1186, %v1182
          %v1403 = vpack.c.b16 %v1191, %v1187
          %v1404 = vpack.c.b16 %v1192, %v1188
          %v1405 = vpack.c.b16 %v1193, %v1189
          %v1406 = vpack.c.b16 %v1194, %v1190
          %v1407 = vpack.c.b16 %v1199, %v1195
          %v1408 = vpack.c.b16 %v1200, %v1196
          %v1409 = vpack.c.b16 %v1201, %v1197
          %v1410 = vpack.c.b16 %v1202, %v1198
          %v1411 = vpack.c.b16 %v1207, %v1203
          %v1412 = vpack.c.b16 %v1208, %v1204
          %v1413 = vpack.c.b16 %v1209, %v1205
          %v1414 = vpack.c.b16 %v1210, %v1206
          %v1415 = vpack.c.b16 %v1215, %v1211
          %v1416 = vpack.c.b16 %v1216, %v1212
          %v1417 = vpack.c.b16 %v1217, %v1213
          %v1418 = vpack.c.b16 %v1218, %v1214
          %v1419 = vpack.c.b16 %v1223, %v1219
          %v1420 = vpack.c.b16 %v1224, %v1220
          %v1421 = vpack.c.b16 %v1225, %v1221
          %v1422 = vpack.c.b16 %v1226, %v1222
          %v1423 = vpack.c.b16 %v1231, %v1227
          %v1424 = vpack.c.b16 %v1232, %v1228
          %v1425 = vpack.c.b16 %v1233, %v1229
          %v1426 = vpack.c.b16 %v1234, %v1230
          %v1427 = vpack.c.b16 %v1239, %v1235
          %v1428 = vpack.c.b16 %v1240, %v1236
          %v1429 = vpack.c.b16 %v1241, %v1237
          %v1430 = vpack.c.b16 %v1242, %v1238
          %v1431 = vpack.c.b16 %v1247, %v1243
          %v1432 = vpack.c.b16 %v1248, %v1244
          %v1433 = vpack.c.b16 %v1249, %v1245
          %v1434 = vpack.c.b16 %v1250, %v1246
          %v1435 = vpack.c.b16 %v1255, %v1251
          %v1436 = vpack.c.b16 %v1256, %v1252
          %v1437 = vpack.c.b16 %v1257, %v1253
          %v1438 = vpack.c.b16 %v1258, %v1254
          %v1439 = vpack.c.b16 %v1263, %v1259
          %v1440 = vpack.c.b16 %v1264, %v1260
          %v1441 = vpack.c.b16 %v1265, %v1261
          %v1442 = vpack.c.b16 %v1266, %v1262
          %v1443 = vpack.c.b16 %v1271, %v1267
          %v1444 = vpack.c.b16 %v1272, %v1268
          %v1445 = vpack.c.b16 %v1273, %v1269
          %v1446 = vpack.c.b16 %v1274, %v1270
          %v1447 = vpack.c.b16 %v1279, %v1275
          %v1448 = vpack.c.b16 %v1280, %v1276
          %v1449 = vpack.c.b16 %v1281, %v1277
          %v1450 = vpack.c.b16 %v1282, %v1278
          %v1451 = vpack.c.b16 %v1287, %v1283
          %v1452 = vpack.c.b16 %v1288, %v1284
          %v1453 = vpack.c.b16 %v1289, %v1285
          %v1454 = vpack.c.b16 %v1290, %v1286
          %v1455 = vpack.c.b16 %v1295, %v1291
          %v1456 = vpack.c.b16 %v1296, %v1292
          %v1457 = vpack.c.b16 %v1297, %v1293
          %v1458 = vpack.c.b16 %v1298, %v1294
          %v1459 = vpack.c.b16 %v1303, %v1299
          %v1460 = vpack.c.b16 %v1304, %v1300
          %v1461 = vpack.c.b16 %v1305, %v1301
          %v1462 = vpack.c.b16 %v1306, %v1302
          %v1463 = vpack.c.b16 %v1311, %v1307
          %v1464 = vpack.c.b16 %v1312, %v1308
          %v1465 = vpack.c.b16 %v1313, %v1309
          %v1466 = vpack.c.b16 %v1314, %v1310
          %v1467 = vpack.c.b16 %v1319, %v1315
          %v1468 = vpack.c.b16 %v1320, %v1316
          %v1469 = vpack.c.b16 %v1321, %v1317
          %v1470 = vpack.c.b16 %v1322, %v1318
          %v1471 = vpack.c.b16 %v1327, %v1323
          %v1472 = vpack.c.b16 %v1328, %v1324
          %v1473 = vpack.c.b16 %v1329, %v1325
          %v1474 = vpack.c.b16 %v1330, %v1326
          %v1475 = vpack.c.b16 %v1335, %v1331
          %v1476 = vpack.c.b16 %v1336, %v1332
          %v1477 = vpack.c.b16 %v1337, %v1333
          %v1478 = vpack.c.b16 %v1338, %v1334
          %v1479 = vpack.c.b16 %v1343, %v1339
          %v1480 = vpack.c.b16 %v1344, %v1340
          %v1481 = vpack.c.b16 %v1345, %v1341
          %v1482 = vpack.c.b16 %v1346, %v1342
          %v1483 = vpack.c.b16 %v1351, %v1347
          %v1484 = vpack.c.b16 %v1352, %v1348
          %v1485 = vpack.c.b16 %v1353, %v1349
          %v1486 = vpack.c.b16 %v1354, %v1350
          %v1487 = vpack.c.b16 %v1359, %v1355
          %v1488 = vpack.c.b16 %v1360, %v1356
          %v1489 = vpack.c.b16 %v1361, %v1357
          %v1490 = vpack.c.b16 %v1362, %v1358
          %1619 = vmatprep.subr.bf16.mxu0 %v1392
          %1620 = vmatpush1.bf16.msra.mxu0 %v1391
          %1621 = vmatprep.subr.bf16.mxu0 %v1388
          %1622 = vmatpush1.bf16.msra.mxu0 %v1387
          %1623 = vmatprep.subr.bf16.mxu0 %v1384
          %1624 = vmatpush1.bf16.msra.mxu0 %v1383
          %1625 = vmatprep.subr.bf16.mxu0 %v1380
          %1626 = vmatpush1.bf16.msra.mxu0 %v1379
          %1627 = vmatprep.subr.bf16.mxu0 %v1376
          %1628 = vmatpush1.bf16.msra.mxu0 %v1375
          %1629 = vmatprep.subr.bf16.mxu0 %v1372
          %1630 = vmatpush1.bf16.msra.mxu0 %v1371
          %1631 = vmatprep.subr.bf16.mxu0 %v1368
          %1632 = vmatpush1.bf16.msra.mxu0 %v1367
          %1633 = vmatprep.subr.bf16.mxu0 %v1364
          %1634 = vmatpush1.bf16.msra.mxu0 %v1363
          %1635 = vmatprep.subr.bf16.mxu0 %v1424
          %1636 = vmatpush2.bf16.msra.mxu0 %v1423
          %1637 = vmatprep.subr.bf16.mxu0 %v1420
          %1638 = vmatpush2.bf16.msra.mxu0 %v1419
          %1639 = vmatprep.subr.bf16.mxu0 %v1416
          %1640 = vmatpush2.bf16.msra.mxu0 %v1415
          %1641 = vmatprep.subr.bf16.mxu0 %v1412
          %1642 = vmatpush2.bf16.msra.mxu0 %v1411
          %1643 = vmatprep.subr.bf16.mxu0 %v1408
          %1644 = vmatpush2.bf16.msra.mxu0 %v1407
          %1645 = vmatprep.subr.bf16.mxu0 %v1404
          %1646 = vmatpush2.bf16.msra.mxu0 %v1403
          %1647 = vmatprep.subr.bf16.mxu0 %v1400
          %1648 = vmatpush2.bf16.msra.mxu0 %v1399
          %1649 = vmatprep.subr.bf16.mxu0 %v1396
          %1650 = vmatpush2.bf16.msra.mxu0 %v1395
          %1651 = vmatprep.mubr.bf16.mxu0 %v961
          %1652 = vmatmul.mubr.bf16.gmra.mxu0 %v960
          %v1653 = vpop.f32.mrf.mxu0
          %v1654 = vadd.f32 %v975, %v1653
          %v1655 = vpop.f32.mrf.mxu0
          %v1656 = vadd.f32 %v976, %v1655
          %v1657 = vpop.f32.mrf.mxu0
          %v1658 = vpop.f32.mrf.mxu0
          %1659 = vdwg.mxu0
          %1660 = vmatprep.subr.bf16.mxu0 %v1456
          %1661 = vmatpush1.bf16.msra.mxu0 %v1455
          %1662 = vmatprep.subr.bf16.mxu0 %v1452
          %1663 = vmatpush1.bf16.msra.mxu0 %v1451
          %1664 = vmatprep.subr.bf16.mxu0 %v1448
          %1665 = vmatpush1.bf16.msra.mxu0 %v1447
          %1666 = vmatprep.subr.bf16.mxu0 %v1444
          %1667 = vmatpush1.bf16.msra.mxu0 %v1443
          %1668 = vmatprep.subr.bf16.mxu0 %v1440
          %1669 = vmatpush1.bf16.msra.mxu0 %v1439
          %1670 = vmatprep.subr.bf16.mxu0 %v1436
          %1671 = vmatpush1.bf16.msra.mxu0 %v1435
          %1672 = vmatprep.subr.bf16.mxu0 %v1432
          %1673 = vmatpush1.bf16.msra.mxu0 %v1431
          %1674 = vmatprep.subr.bf16.mxu0 %v1428
          %1675 = vmatpush1.bf16.msra.mxu0 %v1427
          %1676 = vmatprep.subr.bf16.mxu0 %v1488
          %1677 = vmatpush2.bf16.msra.mxu0 %v1487
          %1678 = vmatprep.subr.bf16.mxu0 %v1484
          %1679 = vmatpush2.bf16.msra.mxu0 %v1483
          %1680 = vmatprep.subr.bf16.mxu0 %v1480
          %1681 = vmatpush2.bf16.msra.mxu0 %v1479
          %1682 = vmatprep.subr.bf16.mxu0 %v1476
          %1683 = vmatpush2.bf16.msra.mxu0 %v1475
          %1684 = vmatprep.subr.bf16.mxu0 %v1472
          %1685 = vmatpush2.bf16.msra.mxu0 %v1471
          %1686 = vmatprep.subr.bf16.mxu0 %v1468
          %1687 = vmatpush2.bf16.msra.mxu0 %v1467
          %1688 = vmatprep.subr.bf16.mxu0 %v1464
          %1689 = vmatpush2.bf16.msra.mxu0 %v1463
          %1690 = vmatprep.subr.bf16.mxu0 %v1460
          %1691 = vmatpush2.bf16.msra.mxu0 %v1459
          %1692 = vmatprep.mubr.bf16.mxu0 %v963
          %1693 = vmatmul.mubr.bf16.gmra.mxu0 %v962
          %v1694 = vpop.f32.mrf.mxu0
          %v1695 = vadd.f32 %v1654, %v1694
          %v1696 = vpop.f32.mrf.mxu0
          %v1697 = vadd.f32 %v1656, %v1696
          %v1698 = vpop.f32.mrf.mxu0
          %v1699 = vpop.f32.mrf.mxu0
          %1700 = vdwg.mxu0
          %1701 = vmatprep.subr.bf16.mxu0 %v1394
          %1702 = vmatpush1.bf16.msra.mxu0 %v1393
          %1703 = vmatprep.subr.bf16.mxu0 %v1390
          %1704 = vmatpush1.bf16.msra.mxu0 %v1389
          %1705 = vmatprep.subr.bf16.mxu0 %v1386
          %1706 = vmatpush1.bf16.msra.mxu0 %v1385
          %1707 = vmatprep.subr.bf16.mxu0 %v1382
          %1708 = vmatpush1.bf16.msra.mxu0 %v1381
          %1709 = vmatprep.subr.bf16.mxu0 %v1378
          %1710 = vmatpush1.bf16.msra.mxu0 %v1377
          %1711 = vmatprep.subr.bf16.mxu0 %v1374
          %1712 = vmatpush1.bf16.msra.mxu0 %v1373
          %1713 = vmatprep.subr.bf16.mxu0 %v1370
          %1714 = vmatpush1.bf16.msra.mxu0 %v1369
          %1715 = vmatprep.subr.bf16.mxu0 %v1366
          %1716 = vmatpush1.bf16.msra.mxu0 %v1365
          %1717 = vmatprep.subr.bf16.mxu0 %v1426
          %1718 = vmatpush2.bf16.msra.mxu0 %v1425
          %1719 = vmatprep.subr.bf16.mxu0 %v1422
          %1720 = vmatpush2.bf16.msra.mxu0 %v1421
          %1721 = vmatprep.subr.bf16.mxu0 %v1418
          %1722 = vmatpush2.bf16.msra.mxu0 %v1417
          %1723 = vmatprep.subr.bf16.mxu0 %v1414
          %1724 = vmatpush2.bf16.msra.mxu0 %v1413
          %1725 = vmatprep.subr.bf16.mxu0 %v1410
          %1726 = vmatpush2.bf16.msra.mxu0 %v1409
          %1727 = vmatprep.subr.bf16.mxu0 %v1406
          %1728 = vmatpush2.bf16.msra.mxu0 %v1405
          %1729 = vmatprep.subr.bf16.mxu0 %v1402
          %1730 = vmatpush2.bf16.msra.mxu0 %v1401
          %1731 = vmatprep.subr.bf16.mxu0 %v1398
          %1732 = vmatpush2.bf16.msra.mxu0 %v1397
          %1733 = vmatprep.mubr.bf16.mxu0 %v961
          %1734 = vmatmul.mubr.bf16.gmra.mxu0 %v960
          %v1735 = vpop.f32.mrf.mxu0
          %v1736 = vadd.f32 %v977, %v1735
          %v1737 = vpop.f32.mrf.mxu0
          %v1738 = vadd.f32 %v978, %v1737
          %v1739 = vpop.f32.mrf.mxu0
          %v1740 = vpop.f32.mrf.mxu0
          %1741 = vdwg.mxu0
          %1742 = vmatprep.subr.bf16.mxu0 %v1458
          %1743 = vmatpush1.bf16.msra.mxu0 %v1457
          %1744 = vmatprep.subr.bf16.mxu0 %v1454
          %1745 = vmatpush1.bf16.msra.mxu0 %v1453
          %1746 = vmatprep.subr.bf16.mxu0 %v1450
          %1747 = vmatpush1.bf16.msra.mxu0 %v1449
          %1748 = vmatprep.subr.bf16.mxu0 %v1446
          %1749 = vmatpush1.bf16.msra.mxu0 %v1445
          %1750 = vmatprep.subr.bf16.mxu0 %v1442
          %1751 = vmatpush1.bf16.msra.mxu0 %v1441
          %1752 = vmatprep.subr.bf16.mxu0 %v1438
          %1753 = vmatpush1.bf16.msra.mxu0 %v1437
          %1754 = vmatprep.subr.bf16.mxu0 %v1434
          %1755 = vmatpush1.bf16.msra.mxu0 %v1433
          %1756 = vmatprep.subr.bf16.mxu0 %v1430
          %1757 = vmatpush1.bf16.msra.mxu0 %v1429
          %1758 = vmatprep.subr.bf16.mxu0 %v1490
          %1759 = vmatpush2.bf16.msra.mxu0 %v1489
          %1760 = vmatprep.subr.bf16.mxu0 %v1486
          %1761 = vmatpush2.bf16.msra.mxu0 %v1485
          %1762 = vmatprep.subr.bf16.mxu0 %v1482
          %1763 = vmatpush2.bf16.msra.mxu0 %v1481
          %1764 = vmatprep.subr.bf16.mxu0 %v1478
          %1765 = vmatpush2.bf16.msra.mxu0 %v1477
          %1766 = vmatprep.subr.bf16.mxu0 %v1474
          %1767 = vmatpush2.bf16.msra.mxu0 %v1473
          %1768 = vmatprep.subr.bf16.mxu0 %v1470
          %1769 = vmatpush2.bf16.msra.mxu0 %v1469
          %1770 = vmatprep.subr.bf16.mxu0 %v1466
          %1771 = vmatpush2.bf16.msra.mxu0 %v1465
          %1772 = vmatprep.subr.bf16.mxu0 %v1462
          %1773 = vmatpush2.bf16.msra.mxu0 %v1461
          %1774 = vmatprep.mubr.bf16.mxu0 %v963
          %1775 = vmatmul.mubr.bf16.gmra.mxu0 %v962
          %v1776 = vpop.f32.mrf.mxu0
          %v1777 = vadd.f32 %v1736, %v1776
          %v1778 = vpop.f32.mrf.mxu0
          %v1779 = vadd.f32 %v1738, %v1778
          %v1780 = vpop.f32.mrf.mxu0
          %v1781 = vpop.f32.mrf.mxu0
          %1782 = vdwg.mxu0
          %s1783 = sadd.s32 %s966, 4
          %s1784 = smul.addr %s1783, 8
          %s1785 = scalar_lea.vmem [#allocation2], %s1784
          %1786 = vst [vmem:[%s1785] sm:$0xff] %v1695
          %1787 = vst [vmem:[%s1785 + $0x8] sm:$0xff] %v1697
          %1788 = vst [vmem:[%s1785 + $0x10] sm:$0xff] %v1777
          %1789 = vst [vmem:[%s1785 + $0x18] sm:$0xff] %v1779
          %p1790 = scmp.eq.s32.totalorder %s32, 7
          // Predicated region
          $region69: #{tpu_custom_call.1} parent=67 // pred_check
            %p1791 = pneg %p1790
          $region70: #{tpu_custom_call.1} parent=67 // pred_check_branch
            %1793 = sbr.rel (%p1791) target = $region72
          $region71: #{tpu_custom_call.1} parent=67 // pred_region
            %v1794 = vrot.slane %v1695, 4
            %v1795 = vmax.f32 %v1695, %v1794
            %v1796 = vrot.slane %v1795, 2
            %v1797 = vmax.f32 %v1795, %v1796
            %v1798 = vrot.slane %v1797, 1
            %v1799 = vmax.f32 %v1797, %v1798
            %v1800 = vrot.slane %v1697, 4
            %v1801 = vmax.f32 %v1697, %v1800
            %v1802 = vrot.slane %v1801, 2
            %v1803 = vmax.f32 %v1801, %v1802
            %v1804 = vrot.slane %v1803, 1
            %v1805 = vmax.f32 %v1803, %v1804
            %v1806 = vrot.slane %v1777, 4
            %v1807 = vmax.f32 %v1777, %v1806
            %v1808 = vrot.slane %v1807, 2
            %v1809 = vmax.f32 %v1807, %v1808
            %v1810 = vrot.slane %v1809, 1
            %v1811 = vmax.f32 %v1809, %v1810
            %v1812 = vrot.slane %v1779, 4
            %v1813 = vmax.f32 %v1779, %v1812
            %v1814 = vrot.slane %v1813, 2
            %v1815 = vmax.f32 %v1813, %v1814
            %v1816 = vrot.slane %v1815, 1
            %v1817 = vmax.f32 %v1815, %v1816
            %v1818 = vsub.f32 %v1695, %v1799
            %v1819 = vsub.f32 %v1697, %v1805
            %v1820 = vsub.f32 %v1777, %v1811
            %v1821 = vsub.f32 %v1779, %v1817
            %v1822 = vmul.f32 %v1818, 1.442695
            %v1823 = vpow.pop %v1822
            %v1824 = vmul.f32 %v1819, 1.442695
            %v1825 = vpow.pop %v1824
            %v1826 = vmul.f32 %v1820, 1.442695
            %v1827 = vpow.pop %v1826
            %v1828 = vmul.f32 %v1821, 1.442695
            %v1829 = vpow.pop %v1828
            %v1830 = vrot.slane %v1823, 4
            %v1831 = vadd.f32 %v1823, %v1830
            %v1832 = vrot.slane %v1831, 2
            %v1833 = vadd.f32 %v1831, %v1832
            %v1834 = vrot.slane %v1833, 1
            %v1835 = vadd.f32 %v1833, %v1834
            %v1836 = vrot.slane %v1825, 4
            %v1837 = vadd.f32 %v1825, %v1836
            %v1838 = vrot.slane %v1837, 2
            %v1839 = vadd.f32 %v1837, %v1838
            %v1840 = vrot.slane %v1839, 1
            %v1841 = vadd.f32 %v1839, %v1840
            %v1842 = vrot.slane %v1827, 4
            %v1843 = vadd.f32 %v1827, %v1842
            %v1844 = vrot.slane %v1843, 2
            %v1845 = vadd.f32 %v1843, %v1844
            %v1846 = vrot.slane %v1845, 1
            %v1847 = vadd.f32 %v1845, %v1846
            %v1848 = vrot.slane %v1829, 4
            %v1849 = vadd.f32 %v1829, %v1848
            %v1850 = vrot.slane %v1849, 2
            %v1851 = vadd.f32 %v1849, %v1850
            %v1852 = vrot.slane %v1851, 1
            %v1853 = vadd.f32 %v1851, %v1852
            %v1854 = vlog2.pop %v1835
            %v1855 = vmul.f32 %v1854, 0.6931472
            %v1856 = vlog2.pop %v1841
            %v1857 = vmul.f32 %v1856, 0.6931472
            %v1858 = vlog2.pop %v1847
            %v1859 = vmul.f32 %v1858, 0.6931472
            %v1860 = vlog2.pop %v1853
            %v1861 = vmul.f32 %v1860, 0.6931472
            %v1862 = vsub.f32 %v1818, %v1855
            %v1863 = vsub.f32 %v1819, %v1857
            %v1864 = vsub.f32 %v1820, %v1859
            %v1865 = vsub.f32 %v1821, %v1861
            %1866 = vst [vmem:[%s378] sm:$0xff] %v1862
            %1867 = vst [vmem:[%s378 + $0x8] sm:$0xff] %v1863
            %1868 = vst [vmem:[%s378 + $0x10] sm:$0xff] %v1864
            %1869 = vst [vmem:[%s378 + $0x18] sm:$0xff] %v1865
          $region72: #{tpu_custom_call.1} parent=67 // pred_fallthru
            _
        $region68: #{tpu_custom_call.1} parent=47 // pred_fallthru
          _
        %p1870 = scmp.ne.s32.totalorder %s821, 1
        %p1871 = pnand %p823, %p1870
        %p1872 = pneg %p1871
        // Predicated region
        $region73: #{tpu_custom_call.1} parent=47 // pred_check
          _
        $region74: #{tpu_custom_call.1} parent=47 // pred_check_branch
          %1874 = sbr.rel (%p1871) target = $region76
        $region75: #{tpu_custom_call.1} parent=47 // pred_region
          %v1875 = vld [vmem:[%s338] sm:$0xff]
          %v1876 = vld [vmem:[%s338 + $0x8] sm:$0xff]
          %v1877 = vld [vmem:[%s338 + $0x10] sm:$0xff]
          %v1878 = vld [vmem:[%s338 + $0x18] sm:$0xff]
          %v1879 = vld [vmem:[%s338 + $0x20] sm:$0xff]
          %v1880 = vld [vmem:[%s338 + $0x28] sm:$0xff]
          %v1881 = vld [vmem:[%s338 + $0x30] sm:$0xff]
          %v1882 = vld [vmem:[%s338 + $0x38] sm:$0xff]
          %v1883 = vld [vmem:[%s338 + $0x40] sm:$0xff]
          %v1884 = vld [vmem:[%s338 + $0x48] sm:$0xff]
          %v1885 = vld [vmem:[%s338 + $0x50] sm:$0xff]
          %v1886 = vld [vmem:[%s338 + $0x58] sm:$0xff]
          %v1887 = vld [vmem:[%s338 + $0x60] sm:$0xff]
          %v1888 = vld [vmem:[%s338 + $0x68] sm:$0xff]
          %v1889 = vld [vmem:[%s338 + $0x70] sm:$0xff]
          %v1890 = vld [vmem:[%s338 + $0x78] sm:$0xff]
          %v1891 = vld [vmem:[%s338 + $0x80] sm:$0xff]
          %v1892 = vld [vmem:[%s338 + $0x88] sm:$0xff]
          %v1893 = vld [vmem:[%s338 + $0x90] sm:$0xff]
          %v1894 = vld [vmem:[%s338 + $0x98] sm:$0xff]
          %v1895 = vld [vmem:[%s338 + $0xa0] sm:$0xff]
          %v1896 = vld [vmem:[%s338 + $0xa8] sm:$0xff]
          %v1897 = vld [vmem:[%s338 + $0xb0] sm:$0xff]
          %v1898 = vld [vmem:[%s338 + $0xb8] sm:$0xff]
          %v1899 = vld [vmem:[%s338 + $0xc0] sm:$0xff]
          %v1900 = vld [vmem:[%s338 + $0xc8] sm:$0xff]
          %v1901 = vld [vmem:[%s338 + $0xd0] sm:$0xff]
          %v1902 = vld [vmem:[%s338 + $0xd8] sm:$0xff]
          %v1903 = vld [vmem:[%s338 + $0xe0] sm:$0xff]
          %v1904 = vld [vmem:[%s338 + $0xe8] sm:$0xff]
          %v1905 = vld [vmem:[%s338 + $0xf0] sm:$0xff]
          %v1906 = vld [vmem:[%s338 + $0xf8] sm:$0xff]
          %v1907 = vld [vmem:[%s338 + $0x100] sm:$0xff]
          %v1908 = vld [vmem:[%s338 + $0x108] sm:$0xff]
          %v1909 = vld [vmem:[%s338 + $0x110] sm:$0xff]
          %v1910 = vld [vmem:[%s338 + $0x118] sm:$0xff]
          %v1911 = vld [vmem:[%s338 + $0x120] sm:$0xff]
          %v1912 = vld [vmem:[%s338 + $0x128] sm:$0xff]
          %v1913 = vld [vmem:[%s338 + $0x130] sm:$0xff]
          %v1914 = vld [vmem:[%s338 + $0x138] sm:$0xff]
          %v1915 = vld [vmem:[%s338 + $0x140] sm:$0xff]
          %v1916 = vld [vmem:[%s338 + $0x148] sm:$0xff]
          %v1917 = vld [vmem:[%s338 + $0x150] sm:$0xff]
          %v1918 = vld [vmem:[%s338 + $0x158] sm:$0xff]
          %v1919 = vld [vmem:[%s338 + $0x160] sm:$0xff]
          %v1920 = vld [vmem:[%s338 + $0x168] sm:$0xff]
          %v1921 = vld [vmem:[%s338 + $0x170] sm:$0xff]
          %v1922 = vld [vmem:[%s338 + $0x178] sm:$0xff]
          %v1923 = vld [vmem:[%s338 + $0x180] sm:$0xff]
          %v1924 = vld [vmem:[%s338 + $0x188] sm:$0xff]
          %v1925 = vld [vmem:[%s338 + $0x190] sm:$0xff]
          %v1926 = vld [vmem:[%s338 + $0x198] sm:$0xff]
          %v1927 = vld [vmem:[%s338 + $0x1a0] sm:$0xff]
          %v1928 = vld [vmem:[%s338 + $0x1a8] sm:$0xff]
          %v1929 = vld [vmem:[%s338 + $0x1b0] sm:$0xff]
          %v1930 = vld [vmem:[%s338 + $0x1b8] sm:$0xff]
          %v1931 = vld [vmem:[%s338 + $0x1c0] sm:$0xff]
          %v1932 = vld [vmem:[%s338 + $0x1c8] sm:$0xff]
          %v1933 = vld [vmem:[%s338 + $0x1d0] sm:$0xff]
          %v1934 = vld [vmem:[%s338 + $0x1d8] sm:$0xff]
          %v1935 = vld [vmem:[%s338 + $0x1e0] sm:$0xff]
          %v1936 = vld [vmem:[%s338 + $0x1e8] sm:$0xff]
          %v1937 = vld [vmem:[%s338 + $0x1f0] sm:$0xff]
          %v1938 = vld [vmem:[%s338 + $0x1f8] sm:$0xff]
          %v1939 = vld [vmem:[%s338 + $0x200] sm:$0xff]
          %v1940 = vld [vmem:[%s338 + $0x208] sm:$0xff]
          %v1941 = vld [vmem:[%s338 + $0x210] sm:$0xff]
          %v1942 = vld [vmem:[%s338 + $0x218] sm:$0xff]
          %v1943 = vld [vmem:[%s338 + $0x220] sm:$0xff]
          %v1944 = vld [vmem:[%s338 + $0x228] sm:$0xff]
          %v1945 = vld [vmem:[%s338 + $0x230] sm:$0xff]
          %v1946 = vld [vmem:[%s338 + $0x238] sm:$0xff]
          %v1947 = vld [vmem:[%s338 + $0x240] sm:$0xff]
          %v1948 = vld [vmem:[%s338 + $0x248] sm:$0xff]
          %v1949 = vld [vmem:[%s338 + $0x250] sm:$0xff]
          %v1950 = vld [vmem:[%s338 + $0x258] sm:$0xff]
          %v1951 = vld [vmem:[%s338 + $0x260] sm:$0xff]
          %v1952 = vld [vmem:[%s338 + $0x268] sm:$0xff]
          %v1953 = vld [vmem:[%s338 + $0x270] sm:$0xff]
          %v1954 = vld [vmem:[%s338 + $0x278] sm:$0xff]
          %v1955 = vld [vmem:[%s338 + $0x280] sm:$0xff]
          %v1956 = vld [vmem:[%s338 + $0x288] sm:$0xff]
          %v1957 = vld [vmem:[%s338 + $0x290] sm:$0xff]
          %v1958 = vld [vmem:[%s338 + $0x298] sm:$0xff]
          %v1959 = vld [vmem:[%s338 + $0x2a0] sm:$0xff]
          %v1960 = vld [vmem:[%s338 + $0x2a8] sm:$0xff]
          %v1961 = vld [vmem:[%s338 + $0x2b0] sm:$0xff]
          %v1962 = vld [vmem:[%s338 + $0x2b8] sm:$0xff]
          %v1963 = vld [vmem:[%s338 + $0x2c0] sm:$0xff]
          %v1964 = vld [vmem:[%s338 + $0x2c8] sm:$0xff]
          %v1965 = vld [vmem:[%s338 + $0x2d0] sm:$0xff]
          %v1966 = vld [vmem:[%s338 + $0x2d8] sm:$0xff]
          %v1967 = vld [vmem:[%s338 + $0x2e0] sm:$0xff]
          %v1968 = vld [vmem:[%s338 + $0x2e8] sm:$0xff]
          %v1969 = vld [vmem:[%s338 + $0x2f0] sm:$0xff]
          %v1970 = vld [vmem:[%s338 + $0x2f8] sm:$0xff]
          %v1971 = vld [vmem:[%s338 + $0x300] sm:$0xff]
          %v1972 = vld [vmem:[%s338 + $0x308] sm:$0xff]
          %v1973 = vld [vmem:[%s338 + $0x310] sm:$0xff]
          %v1974 = vld [vmem:[%s338 + $0x318] sm:$0xff]
          %v1975 = vld [vmem:[%s338 + $0x320] sm:$0xff]
          %v1976 = vld [vmem:[%s338 + $0x328] sm:$0xff]
          %v1977 = vld [vmem:[%s338 + $0x330] sm:$0xff]
          %v1978 = vld [vmem:[%s338 + $0x338] sm:$0xff]
          %v1979 = vld [vmem:[%s338 + $0x340] sm:$0xff]
          %v1980 = vld [vmem:[%s338 + $0x348] sm:$0xff]
          %v1981 = vld [vmem:[%s338 + $0x350] sm:$0xff]
          %v1982 = vld [vmem:[%s338 + $0x358] sm:$0xff]
          %v1983 = vld [vmem:[%s338 + $0x360] sm:$0xff]
          %v1984 = vld [vmem:[%s338 + $0x368] sm:$0xff]
          %v1985 = vld [vmem:[%s338 + $0x370] sm:$0xff]
          %v1986 = vld [vmem:[%s338 + $0x378] sm:$0xff]
          %v1987 = vld [vmem:[%s338 + $0x380] sm:$0xff]
          %v1988 = vld [vmem:[%s338 + $0x388] sm:$0xff]
          %v1989 = vld [vmem:[%s338 + $0x390] sm:$0xff]
          %v1990 = vld [vmem:[%s338 + $0x398] sm:$0xff]
          %v1991 = vld [vmem:[%s338 + $0x3a0] sm:$0xff]
          %v1992 = vld [vmem:[%s338 + $0x3a8] sm:$0xff]
          %v1993 = vld [vmem:[%s338 + $0x3b0] sm:$0xff]
          %v1994 = vld [vmem:[%s338 + $0x3b8] sm:$0xff]
          %v1995 = vld [vmem:[%s338 + $0x3c0] sm:$0xff]
          %v1996 = vld [vmem:[%s338 + $0x3c8] sm:$0xff]
          %v1997 = vld [vmem:[%s338 + $0x3d0] sm:$0xff]
          %v1998 = vld [vmem:[%s338 + $0x3d8] sm:$0xff]
          %v1999 = vld [vmem:[%s338 + $0x3e0] sm:$0xff]
          %v2000 = vld [vmem:[%s338 + $0x3e8] sm:$0xff]
          %v2001 = vld [vmem:[%s338 + $0x3f0] sm:$0xff]
          %v2002 = vld [vmem:[%s338 + $0x3f8] sm:$0xff]
          %s2003 = scalar_lea.vmem [#allocation2], 32
          %v2004 = vld [vmem:[%s2003] sm:$0xff]
          %v2005 = vld [vmem:[%s2003 + $0x8] sm:$0xff]
          %v2006 = vld [vmem:[%s2003 + $0x10] sm:$0xff]
          %v2007 = vld [vmem:[%s2003 + $0x18] sm:$0xff]
          %v2008 = vpack.c.bf16 %v2004, %v2004
          %v2009 = vpack.c.bf16 %v2005, %v2005
          %v2010 = vpack.c.bf16 %v2006, %v2006
          %v2011 = vpack.c.bf16 %v2007, %v2007
          %s2012 = ssub.s32 7, %s32
          %s2013 = sld [smem:[#allocation10 + %s2012]]
          %s2014 = sshra.s32 %s388, 7
          %s2015 = sand.u32 %s388, 127
          %s2016 = smul.addr %s2014, 8
          %s2017 = scalar_lea.vmem [#allocation3], %s2016
          %v2018 = vld [vmem:[%s2017] sm:$0xff]
          %v2019 = vld [vmem:[%s2017 + $0x8] sm:$0xff]
          %v2020 = vld [vmem:[%s2017 + $0x10] sm:$0xff]
          %v2021 = vld [vmem:[%s2017 + $0x18] sm:$0xff]
          %v2022 = vstv %s2013
          %v2023 = vmul.f32 %v2022, %v2018
          %v2024 = vmul.f32 %v2022, %v2019
          %v2025 = vmul.f32 %v2022, %v2020
          %v2026 = vmul.f32 %v2022, %v2021
          %v2155 = vunpack.c.l.b16 %v1875
          %v2156 = vunpack.c.h.b16 %v1875
          %v2157 = vunpack.c.l.b16 %v1876
          %v2158 = vunpack.c.h.b16 %v1876
          %v2159 = vunpack.c.l.b16 %v1877
          %v2160 = vunpack.c.h.b16 %v1877
          %v2161 = vunpack.c.l.b16 %v1878
          %v2162 = vunpack.c.h.b16 %v1878
          %v2163 = vunpack.c.l.b16 %v1879
          %v2164 = vunpack.c.h.b16 %v1879
          %v2165 = vunpack.c.l.b16 %v1880
          %v2166 = vunpack.c.h.b16 %v1880
          %v2167 = vunpack.c.l.b16 %v1881
          %v2168 = vunpack.c.h.b16 %v1881
          %v2169 = vunpack.c.l.b16 %v1882
          %v2170 = vunpack.c.h.b16 %v1882
          %v2171 = vunpack.c.l.b16 %v1883
          %v2172 = vunpack.c.h.b16 %v1883
          %v2173 = vunpack.c.l.b16 %v1884
          %v2174 = vunpack.c.h.b16 %v1884
          %v2175 = vunpack.c.l.b16 %v1885
          %v2176 = vunpack.c.h.b16 %v1885
          %v2177 = vunpack.c.l.b16 %v1886
          %v2178 = vunpack.c.h.b16 %v1886
          %v2179 = vunpack.c.l.b16 %v1887
          %v2180 = vunpack.c.h.b16 %v1887
          %v2181 = vunpack.c.l.b16 %v1888
          %v2182 = vunpack.c.h.b16 %v1888
          %v2183 = vunpack.c.l.b16 %v1889
          %v2184 = vunpack.c.h.b16 %v1889
          %v2185 = vunpack.c.l.b16 %v1890
          %v2186 = vunpack.c.h.b16 %v1890
          %v2187 = vunpack.c.l.b16 %v1891
          %v2188 = vunpack.c.h.b16 %v1891
          %v2189 = vunpack.c.l.b16 %v1892
          %v2190 = vunpack.c.h.b16 %v1892
          %v2191 = vunpack.c.l.b16 %v1893
          %v2192 = vunpack.c.h.b16 %v1893
          %v2193 = vunpack.c.l.b16 %v1894
          %v2194 = vunpack.c.h.b16 %v1894
          %v2195 = vunpack.c.l.b16 %v1895
          %v2196 = vunpack.c.h.b16 %v1895
          %v2197 = vunpack.c.l.b16 %v1896
          %v2198 = vunpack.c.h.b16 %v1896
          %v2199 = vunpack.c.l.b16 %v1897
          %v2200 = vunpack.c.h.b16 %v1897
          %v2201 = vunpack.c.l.b16 %v1898
          %v2202 = vunpack.c.h.b16 %v1898
          %v2203 = vunpack.c.l.b16 %v1899
          %v2204 = vunpack.c.h.b16 %v1899
          %v2205 = vunpack.c.l.b16 %v1900
          %v2206 = vunpack.c.h.b16 %v1900
          %v2207 = vunpack.c.l.b16 %v1901
          %v2208 = vunpack.c.h.b16 %v1901
          %v2209 = vunpack.c.l.b16 %v1902
          %v2210 = vunpack.c.h.b16 %v1902
          %v2211 = vunpack.c.l.b16 %v1903
          %v2212 = vunpack.c.h.b16 %v1903
          %v2213 = vunpack.c.l.b16 %v1904
          %v2214 = vunpack.c.h.b16 %v1904
          %v2215 = vunpack.c.l.b16 %v1905
          %v2216 = vunpack.c.h.b16 %v1905
          %v2217 = vunpack.c.l.b16 %v1906
          %v2218 = vunpack.c.h.b16 %v1906
          %v2219 = vunpack.c.l.b16 %v1907
          %v2220 = vunpack.c.h.b16 %v1907
          %v2221 = vunpack.c.l.b16 %v1908
          %v2222 = vunpack.c.h.b16 %v1908
          %v2223 = vunpack.c.l.b16 %v1909
          %v2224 = vunpack.c.h.b16 %v1909
          %v2225 = vunpack.c.l.b16 %v1910
          %v2226 = vunpack.c.h.b16 %v1910
          %v2227 = vunpack.c.l.b16 %v1911
          %v2228 = vunpack.c.h.b16 %v1911
          %v2229 = vunpack.c.l.b16 %v1912
          %v2230 = vunpack.c.h.b16 %v1912
          %v2231 = vunpack.c.l.b16 %v1913
          %v2232 = vunpack.c.h.b16 %v1913
          %v2233 = vunpack.c.l.b16 %v1914
          %v2234 = vunpack.c.h.b16 %v1914
          %v2235 = vunpack.c.l.b16 %v1915
          %v2236 = vunpack.c.h.b16 %v1915
          %v2237 = vunpack.c.l.b16 %v1916
          %v2238 = vunpack.c.h.b16 %v1916
          %v2239 = vunpack.c.l.b16 %v1917
          %v2240 = vunpack.c.h.b16 %v1917
          %v2241 = vunpack.c.l.b16 %v1918
          %v2242 = vunpack.c.h.b16 %v1918
          %v2243 = vunpack.c.l.b16 %v1919
          %v2244 = vunpack.c.h.b16 %v1919
          %v2245 = vunpack.c.l.b16 %v1920
          %v2246 = vunpack.c.h.b16 %v1920
          %v2247 = vunpack.c.l.b16 %v1921
          %v2248 = vunpack.c.h.b16 %v1921
          %v2249 = vunpack.c.l.b16 %v1922
          %v2250 = vunpack.c.h.b16 %v1922
          %v2251 = vunpack.c.l.b16 %v1923
          %v2252 = vunpack.c.h.b16 %v1923
          %v2253 = vunpack.c.l.b16 %v1924
          %v2254 = vunpack.c.h.b16 %v1924
          %v2255 = vunpack.c.l.b16 %v1925
          %v2256 = vunpack.c.h.b16 %v1925
          %v2257 = vunpack.c.l.b16 %v1926
          %v2258 = vunpack.c.h.b16 %v1926
          %v2259 = vunpack.c.l.b16 %v1927
          %v2260 = vunpack.c.h.b16 %v1927
          %v2261 = vunpack.c.l.b16 %v1928
          %v2262 = vunpack.c.h.b16 %v1928
          %v2263 = vunpack.c.l.b16 %v1929
          %v2264 = vunpack.c.h.b16 %v1929
          %v2265 = vunpack.c.l.b16 %v1930
          %v2266 = vunpack.c.h.b16 %v1930
          %v2267 = vunpack.c.l.b16 %v1931
          %v2268 = vunpack.c.h.b16 %v1931
          %v2269 = vunpack.c.l.b16 %v1932
          %v2270 = vunpack.c.h.b16 %v1932
          %v2271 = vunpack.c.l.b16 %v1933
          %v2272 = vunpack.c.h.b16 %v1933
          %v2273 = vunpack.c.l.b16 %v1934
          %v2274 = vunpack.c.h.b16 %v1934
          %v2275 = vunpack.c.l.b16 %v1935
          %v2276 = vunpack.c.h.b16 %v1935
          %v2277 = vunpack.c.l.b16 %v1936
          %v2278 = vunpack.c.h.b16 %v1936
          %v2279 = vunpack.c.l.b16 %v1937
          %v2280 = vunpack.c.h.b16 %v1937
          %v2281 = vunpack.c.l.b16 %v1938
          %v2282 = vunpack.c.h.b16 %v1938
          %v2283 = vunpack.c.l.b16 %v1939
          %v2284 = vunpack.c.h.b16 %v1939
          %v2285 = vunpack.c.l.b16 %v1940
          %v2286 = vunpack.c.h.b16 %v1940
          %v2287 = vunpack.c.l.b16 %v1941
          %v2288 = vunpack.c.h.b16 %v1941
          %v2289 = vunpack.c.l.b16 %v1942
          %v2290 = vunpack.c.h.b16 %v1942
          %v2291 = vunpack.c.l.b16 %v1943
          %v2292 = vunpack.c.h.b16 %v1943
          %v2293 = vunpack.c.l.b16 %v1944
          %v2294 = vunpack.c.h.b16 %v1944
          %v2295 = vunpack.c.l.b16 %v1945
          %v2296 = vunpack.c.h.b16 %v1945
          %v2297 = vunpack.c.l.b16 %v1946
          %v2298 = vunpack.c.h.b16 %v1946
          %v2299 = vunpack.c.l.b16 %v1947
          %v2300 = vunpack.c.h.b16 %v1947
          %v2301 = vunpack.c.l.b16 %v1948
          %v2302 = vunpack.c.h.b16 %v1948
          %v2303 = vunpack.c.l.b16 %v1949
          %v2304 = vunpack.c.h.b16 %v1949
          %v2305 = vunpack.c.l.b16 %v1950
          %v2306 = vunpack.c.h.b16 %v1950
          %v2307 = vunpack.c.l.b16 %v1951
          %v2308 = vunpack.c.h.b16 %v1951
          %v2309 = vunpack.c.l.b16 %v1952
          %v2310 = vunpack.c.h.b16 %v1952
          %v2311 = vunpack.c.l.b16 %v1953
          %v2312 = vunpack.c.h.b16 %v1953
          %v2313 = vunpack.c.l.b16 %v1954
          %v2314 = vunpack.c.h.b16 %v1954
          %v2315 = vunpack.c.l.b16 %v1955
          %v2316 = vunpack.c.h.b16 %v1955
          %v2317 = vunpack.c.l.b16 %v1956
          %v2318 = vunpack.c.h.b16 %v1956
          %v2319 = vunpack.c.l.b16 %v1957
          %v2320 = vunpack.c.h.b16 %v1957
          %v2321 = vunpack.c.l.b16 %v1958
          %v2322 = vunpack.c.h.b16 %v1958
          %v2323 = vunpack.c.l.b16 %v1959
          %v2324 = vunpack.c.h.b16 %v1959
          %v2325 = vunpack.c.l.b16 %v1960
          %v2326 = vunpack.c.h.b16 %v1960
          %v2327 = vunpack.c.l.b16 %v1961
          %v2328 = vunpack.c.h.b16 %v1961
          %v2329 = vunpack.c.l.b16 %v1962
          %v2330 = vunpack.c.h.b16 %v1962
          %v2331 = vunpack.c.l.b16 %v1963
          %v2332 = vunpack.c.h.b16 %v1963
          %v2333 = vunpack.c.l.b16 %v1964
          %v2334 = vunpack.c.h.b16 %v1964
          %v2335 = vunpack.c.l.b16 %v1965
          %v2336 = vunpack.c.h.b16 %v1965
          %v2337 = vunpack.c.l.b16 %v1966
          %v2338 = vunpack.c.h.b16 %v1966
          %v2339 = vunpack.c.l.b16 %v1967
          %v2340 = vunpack.c.h.b16 %v1967
          %v2341 = vunpack.c.l.b16 %v1968
          %v2342 = vunpack.c.h.b16 %v1968
          %v2343 = vunpack.c.l.b16 %v1969
          %v2344 = vunpack.c.h.b16 %v1969
          %v2345 = vunpack.c.l.b16 %v1970
          %v2346 = vunpack.c.h.b16 %v1970
          %v2347 = vunpack.c.l.b16 %v1971
          %v2348 = vunpack.c.h.b16 %v1971
          %v2349 = vunpack.c.l.b16 %v1972
          %v2350 = vunpack.c.h.b16 %v1972
          %v2351 = vunpack.c.l.b16 %v1973
          %v2352 = vunpack.c.h.b16 %v1973
          %v2353 = vunpack.c.l.b16 %v1974
          %v2354 = vunpack.c.h.b16 %v1974
          %v2355 = vunpack.c.l.b16 %v1975
          %v2356 = vunpack.c.h.b16 %v1975
          %v2357 = vunpack.c.l.b16 %v1976
          %v2358 = vunpack.c.h.b16 %v1976
          %v2359 = vunpack.c.l.b16 %v1977
          %v2360 = vunpack.c.h.b16 %v1977
          %v2361 = vunpack.c.l.b16 %v1978
          %v2362 = vunpack.c.h.b16 %v1978
          %v2363 = vunpack.c.l.b16 %v1979
          %v2364 = vunpack.c.h.b16 %v1979
          %v2365 = vunpack.c.l.b16 %v1980
          %v2366 = vunpack.c.h.b16 %v1980
          %v2367 = vunpack.c.l.b16 %v1981
          %v2368 = vunpack.c.h.b16 %v1981
          %v2369 = vunpack.c.l.b16 %v1982
          %v2370 = vunpack.c.h.b16 %v1982
          %v2371 = vunpack.c.l.b16 %v1983
          %v2372 = vunpack.c.h.b16 %v1983
          %v2373 = vunpack.c.l.b16 %v1984
          %v2374 = vunpack.c.h.b16 %v1984
          %v2375 = vunpack.c.l.b16 %v1985
          %v2376 = vunpack.c.h.b16 %v1985
          %v2377 = vunpack.c.l.b16 %v1986
          %v2378 = vunpack.c.h.b16 %v1986
          %v2379 = vunpack.c.l.b16 %v1987
          %v2380 = vunpack.c.h.b16 %v1987
          %v2381 = vunpack.c.l.b16 %v1988
          %v2382 = vunpack.c.h.b16 %v1988
          %v2383 = vunpack.c.l.b16 %v1989
          %v2384 = vunpack.c.h.b16 %v1989
          %v2385 = vunpack.c.l.b16 %v1990
          %v2386 = vunpack.c.h.b16 %v1990
          %v2387 = vunpack.c.l.b16 %v1991
          %v2388 = vunpack.c.h.b16 %v1991
          %v2389 = vunpack.c.l.b16 %v1992
          %v2390 = vunpack.c.h.b16 %v1992
          %v2391 = vunpack.c.l.b16 %v1993
          %v2392 = vunpack.c.h.b16 %v1993
          %v2393 = vunpack.c.l.b16 %v1994
          %v2394 = vunpack.c.h.b16 %v1994
          %v2395 = vunpack.c.l.b16 %v1995
          %v2396 = vunpack.c.h.b16 %v1995
          %v2397 = vunpack.c.l.b16 %v1996
          %v2398 = vunpack.c.h.b16 %v1996
          %v2399 = vunpack.c.l.b16 %v1997
          %v2400 = vunpack.c.h.b16 %v1997
          %v2401 = vunpack.c.l.b16 %v1998
          %v2402 = vunpack.c.h.b16 %v1998
          %v2403 = vunpack.c.l.b16 %v1999
          %v2404 = vunpack.c.h.b16 %v1999
          %v2405 = vunpack.c.l.b16 %v2000
          %v2406 = vunpack.c.h.b16 %v2000
          %v2407 = vunpack.c.l.b16 %v2001
          %v2408 = vunpack.c.h.b16 %v2001
          %v2409 = vunpack.c.l.b16 %v2002
          %v2410 = vunpack.c.h.b16 %v2002
          %v2411 = vpack.c.b16 %v2159, %v2155
          %v2412 = vpack.c.b16 %v2160, %v2156
          %v2413 = vpack.c.b16 %v2161, %v2157
          %v2414 = vpack.c.b16 %v2162, %v2158
          %v2415 = vpack.c.b16 %v2167, %v2163
          %v2416 = vpack.c.b16 %v2168, %v2164
          %v2417 = vpack.c.b16 %v2169, %v2165
          %v2418 = vpack.c.b16 %v2170, %v2166
          %v2419 = vpack.c.b16 %v2175, %v2171
          %v2420 = vpack.c.b16 %v2176, %v2172
          %v2421 = vpack.c.b16 %v2177, %v2173
          %v2422 = vpack.c.b16 %v2178, %v2174
          %v2423 = vpack.c.b16 %v2183, %v2179
          %v2424 = vpack.c.b16 %v2184, %v2180
          %v2425 = vpack.c.b16 %v2185, %v2181
          %v2426 = vpack.c.b16 %v2186, %v2182
          %v2427 = vpack.c.b16 %v2191, %v2187
          %v2428 = vpack.c.b16 %v2192, %v2188
          %v2429 = vpack.c.b16 %v2193, %v2189
          %v2430 = vpack.c.b16 %v2194, %v2190
          %v2431 = vpack.c.b16 %v2199, %v2195
          %v2432 = vpack.c.b16 %v2200, %v2196
          %v2433 = vpack.c.b16 %v2201, %v2197
          %v2434 = vpack.c.b16 %v2202, %v2198
          %v2435 = vpack.c.b16 %v2207, %v2203
          %v2436 = vpack.c.b16 %v2208, %v2204
          %v2437 = vpack.c.b16 %v2209, %v2205
          %v2438 = vpack.c.b16 %v2210, %v2206
          %v2439 = vpack.c.b16 %v2215, %v2211
          %v2440 = vpack.c.b16 %v2216, %v2212
          %v2441 = vpack.c.b16 %v2217, %v2213
          %v2442 = vpack.c.b16 %v2218, %v2214
          %v2443 = vpack.c.b16 %v2223, %v2219
          %v2444 = vpack.c.b16 %v2224, %v2220
          %v2445 = vpack.c.b16 %v2225, %v2221
          %v2446 = vpack.c.b16 %v2226, %v2222
          %v2447 = vpack.c.b16 %v2231, %v2227
          %v2448 = vpack.c.b16 %v2232, %v2228
          %v2449 = vpack.c.b16 %v2233, %v2229
          %v2450 = vpack.c.b16 %v2234, %v2230
          %v2451 = vpack.c.b16 %v2239, %v2235
          %v2452 = vpack.c.b16 %v2240, %v2236
          %v2453 = vpack.c.b16 %v2241, %v2237
          %v2454 = vpack.c.b16 %v2242, %v2238
          %v2455 = vpack.c.b16 %v2247, %v2243
          %v2456 = vpack.c.b16 %v2248, %v2244
          %v2457 = vpack.c.b16 %v2249, %v2245
          %v2458 = vpack.c.b16 %v2250, %v2246
          %v2459 = vpack.c.b16 %v2255, %v2251
          %v2460 = vpack.c.b16 %v2256, %v2252
          %v2461 = vpack.c.b16 %v2257, %v2253
          %v2462 = vpack.c.b16 %v2258, %v2254
          %v2463 = vpack.c.b16 %v2263, %v2259
          %v2464 = vpack.c.b16 %v2264, %v2260
          %v2465 = vpack.c.b16 %v2265, %v2261
          %v2466 = vpack.c.b16 %v2266, %v2262
          %v2467 = vpack.c.b16 %v2271, %v2267
          %v2468 = vpack.c.b16 %v2272, %v2268
          %v2469 = vpack.c.b16 %v2273, %v2269
          %v2470 = vpack.c.b16 %v2274, %v2270
          %v2471 = vpack.c.b16 %v2279, %v2275
          %v2472 = vpack.c.b16 %v2280, %v2276
          %v2473 = vpack.c.b16 %v2281, %v2277
          %v2474 = vpack.c.b16 %v2282, %v2278
          %v2475 = vpack.c.b16 %v2287, %v2283
          %v2476 = vpack.c.b16 %v2288, %v2284
          %v2477 = vpack.c.b16 %v2289, %v2285
          %v2478 = vpack.c.b16 %v2290, %v2286
          %v2479 = vpack.c.b16 %v2295, %v2291
          %v2480 = vpack.c.b16 %v2296, %v2292
          %v2481 = vpack.c.b16 %v2297, %v2293
          %v2482 = vpack.c.b16 %v2298, %v2294
          %v2483 = vpack.c.b16 %v2303, %v2299
          %v2484 = vpack.c.b16 %v2304, %v2300
          %v2485 = vpack.c.b16 %v2305, %v2301
          %v2486 = vpack.c.b16 %v2306, %v2302
          %v2487 = vpack.c.b16 %v2311, %v2307
          %v2488 = vpack.c.b16 %v2312, %v2308
          %v2489 = vpack.c.b16 %v2313, %v2309
          %v2490 = vpack.c.b16 %v2314, %v2310
          %v2491 = vpack.c.b16 %v2319, %v2315
          %v2492 = vpack.c.b16 %v2320, %v2316
          %v2493 = vpack.c.b16 %v2321, %v2317
          %v2494 = vpack.c.b16 %v2322, %v2318
          %v2495 = vpack.c.b16 %v2327, %v2323
          %v2496 = vpack.c.b16 %v2328, %v2324
          %v2497 = vpack.c.b16 %v2329, %v2325
          %v2498 = vpack.c.b16 %v2330, %v2326
          %v2499 = vpack.c.b16 %v2335, %v2331
          %v2500 = vpack.c.b16 %v2336, %v2332
          %v2501 = vpack.c.b16 %v2337, %v2333
          %v2502 = vpack.c.b16 %v2338, %v2334
          %v2503 = vpack.c.b16 %v2343, %v2339
          %v2504 = vpack.c.b16 %v2344, %v2340
          %v2505 = vpack.c.b16 %v2345, %v2341
          %v2506 = vpack.c.b16 %v2346, %v2342
          %v2507 = vpack.c.b16 %v2351, %v2347
          %v2508 = vpack.c.b16 %v2352, %v2348
          %v2509 = vpack.c.b16 %v2353, %v2349
          %v2510 = vpack.c.b16 %v2354, %v2350
          %v2511 = vpack.c.b16 %v2359, %v2355
          %v2512 = vpack.c.b16 %v2360, %v2356
          %v2513 = vpack.c.b16 %v2361, %v2357
          %v2514 = vpack.c.b16 %v2362, %v2358
          %v2515 = vpack.c.b16 %v2367, %v2363
          %v2516 = vpack.c.b16 %v2368, %v2364
          %v2517 = vpack.c.b16 %v2369, %v2365
          %v2518 = vpack.c.b16 %v2370, %v2366
          %v2519 = vpack.c.b16 %v2375, %v2371
          %v2520 = vpack.c.b16 %v2376, %v2372
          %v2521 = vpack.c.b16 %v2377, %v2373
          %v2522 = vpack.c.b16 %v2378, %v2374
          %v2523 = vpack.c.b16 %v2383, %v2379
          %v2524 = vpack.c.b16 %v2384, %v2380
          %v2525 = vpack.c.b16 %v2385, %v2381
          %v2526 = vpack.c.b16 %v2386, %v2382
          %v2527 = vpack.c.b16 %v2391, %v2387
          %v2528 = vpack.c.b16 %v2392, %v2388
          %v2529 = vpack.c.b16 %v2393, %v2389
          %v2530 = vpack.c.b16 %v2394, %v2390
          %v2531 = vpack.c.b16 %v2399, %v2395
          %v2532 = vpack.c.b16 %v2400, %v2396
          %v2533 = vpack.c.b16 %v2401, %v2397
          %v2534 = vpack.c.b16 %v2402, %v2398
          %v2535 = vpack.c.b16 %v2407, %v2403
          %v2536 = vpack.c.b16 %v2408, %v2404
          %v2537 = vpack.c.b16 %v2409, %v2405
          %v2538 = vpack.c.b16 %v2410, %v2406
          %2667 = vmatprep.subr.bf16.mxu0 %v2440
          %2668 = vmatpush1.bf16.msra.mxu0 %v2439
          %2669 = vmatprep.subr.bf16.mxu0 %v2436
          %2670 = vmatpush1.bf16.msra.mxu0 %v2435
          %2671 = vmatprep.subr.bf16.mxu0 %v2432
          %2672 = vmatpush1.bf16.msra.mxu0 %v2431
          %2673 = vmatprep.subr.bf16.mxu0 %v2428
          %2674 = vmatpush1.bf16.msra.mxu0 %v2427
          %2675 = vmatprep.subr.bf16.mxu0 %v2424
          %2676 = vmatpush1.bf16.msra.mxu0 %v2423
          %2677 = vmatprep.subr.bf16.mxu0 %v2420
          %2678 = vmatpush1.bf16.msra.mxu0 %v2419
          %2679 = vmatprep.subr.bf16.mxu0 %v2416
          %2680 = vmatpush1.bf16.msra.mxu0 %v2415
          %2681 = vmatprep.subr.bf16.mxu0 %v2412
          %2682 = vmatpush1.bf16.msra.mxu0 %v2411
          %2683 = vmatprep.subr.bf16.mxu0 %v2472
          %2684 = vmatpush2.bf16.msra.mxu0 %v2471
          %2685 = vmatprep.subr.bf16.mxu0 %v2468
          %2686 = vmatpush2.bf16.msra.mxu0 %v2467
          %2687 = vmatprep.subr.bf16.mxu0 %v2464
          %2688 = vmatpush2.bf16.msra.mxu0 %v2463
          %2689 = vmatprep.subr.bf16.mxu0 %v2460
          %2690 = vmatpush2.bf16.msra.mxu0 %v2459
          %2691 = vmatprep.subr.bf16.mxu0 %v2456
          %2692 = vmatpush2.bf16.msra.mxu0 %v2455
          %2693 = vmatprep.subr.bf16.mxu0 %v2452
          %2694 = vmatpush2.bf16.msra.mxu0 %v2451
          %2695 = vmatprep.subr.bf16.mxu0 %v2448
          %2696 = vmatpush2.bf16.msra.mxu0 %v2447
          %2697 = vmatprep.subr.bf16.mxu0 %v2444
          %2698 = vmatpush2.bf16.msra.mxu0 %v2443
          %2699 = vmatprep.mubr.bf16.mxu0 %v2009
          %2700 = vmatmul.mubr.bf16.gmra.mxu0 %v2008
          %v2701 = vpop.f32.mrf.mxu0
          %v2702 = vadd.f32 %v2023, %v2701
          %v2703 = vpop.f32.mrf.mxu0
          %v2704 = vadd.f32 %v2024, %v2703
          %v2705 = vpop.f32.mrf.mxu0
          %v2706 = vpop.f32.mrf.mxu0
          %2707 = vdwg.mxu0
          %2708 = vmatprep.subr.bf16.mxu0 %v2504
          %2709 = vmatpush1.bf16.msra.mxu0 %v2503
          %2710 = vmatprep.subr.bf16.mxu0 %v2500
          %2711 = vmatpush1.bf16.msra.mxu0 %v2499
          %2712 = vmatprep.subr.bf16.mxu0 %v2496
          %2713 = vmatpush1.bf16.msra.mxu0 %v2495
          %2714 = vmatprep.subr.bf16.mxu0 %v2492
          %2715 = vmatpush1.bf16.msra.mxu0 %v2491
          %2716 = vmatprep.subr.bf16.mxu0 %v2488
          %2717 = vmatpush1.bf16.msra.mxu0 %v2487
          %2718 = vmatprep.subr.bf16.mxu0 %v2484
          %2719 = vmatpush1.bf16.msra.mxu0 %v2483
          %2720 = vmatprep.subr.bf16.mxu0 %v2480
          %2721 = vmatpush1.bf16.msra.mxu0 %v2479
          %2722 = vmatprep.subr.bf16.mxu0 %v2476
          %2723 = vmatpush1.bf16.msra.mxu0 %v2475
          %2724 = vmatprep.subr.bf16.mxu0 %v2536
          %2725 = vmatpush2.bf16.msra.mxu0 %v2535
          %2726 = vmatprep.subr.bf16.mxu0 %v2532
          %2727 = vmatpush2.bf16.msra.mxu0 %v2531
          %2728 = vmatprep.subr.bf16.mxu0 %v2528
          %2729 = vmatpush2.bf16.msra.mxu0 %v2527
          %2730 = vmatprep.subr.bf16.mxu0 %v2524
          %2731 = vmatpush2.bf16.msra.mxu0 %v2523
          %2732 = vmatprep.subr.bf16.mxu0 %v2520
          %2733 = vmatpush2.bf16.msra.mxu0 %v2519
          %2734 = vmatprep.subr.bf16.mxu0 %v2516
          %2735 = vmatpush2.bf16.msra.mxu0 %v2515
          %2736 = vmatprep.subr.bf16.mxu0 %v2512
          %2737 = vmatpush2.bf16.msra.mxu0 %v2511
          %2738 = vmatprep.subr.bf16.mxu0 %v2508
          %2739 = vmatpush2.bf16.msra.mxu0 %v2507
          %2740 = vmatprep.mubr.bf16.mxu0 %v2011
          %2741 = vmatmul.mubr.bf16.gmra.mxu0 %v2010
          %v2742 = vpop.f32.mrf.mxu0
          %v2743 = vadd.f32 %v2702, %v2742
          %v2744 = vpop.f32.mrf.mxu0
          %v2745 = vadd.f32 %v2704, %v2744
          %v2746 = vpop.f32.mrf.mxu0
          %v2747 = vpop.f32.mrf.mxu0
          %2748 = vdwg.mxu0
          %2749 = vmatprep.subr.bf16.mxu0 %v2442
          %2750 = vmatpush1.bf16.msra.mxu0 %v2441
          %2751 = vmatprep.subr.bf16.mxu0 %v2438
          %2752 = vmatpush1.bf16.msra.mxu0 %v2437
          %2753 = vmatprep.subr.bf16.mxu0 %v2434
          %2754 = vmatpush1.bf16.msra.mxu0 %v2433
          %2755 = vmatprep.subr.bf16.mxu0 %v2430
          %2756 = vmatpush1.bf16.msra.mxu0 %v2429
          %2757 = vmatprep.subr.bf16.mxu0 %v2426
          %2758 = vmatpush1.bf16.msra.mxu0 %v2425
          %2759 = vmatprep.subr.bf16.mxu0 %v2422
          %2760 = vmatpush1.bf16.msra.mxu0 %v2421
          %2761 = vmatprep.subr.bf16.mxu0 %v2418
          %2762 = vmatpush1.bf16.msra.mxu0 %v2417
          %2763 = vmatprep.subr.bf16.mxu0 %v2414
          %2764 = vmatpush1.bf16.msra.mxu0 %v2413
          %2765 = vmatprep.subr.bf16.mxu0 %v2474
          %2766 = vmatpush2.bf16.msra.mxu0 %v2473
          %2767 = vmatprep.subr.bf16.mxu0 %v2470
          %2768 = vmatpush2.bf16.msra.mxu0 %v2469
          %2769 = vmatprep.subr.bf16.mxu0 %v2466
          %2770 = vmatpush2.bf16.msra.mxu0 %v2465
          %2771 = vmatprep.subr.bf16.mxu0 %v2462
          %2772 = vmatpush2.bf16.msra.mxu0 %v2461
          %2773 = vmatprep.subr.bf16.mxu0 %v2458
          %2774 = vmatpush2.bf16.msra.mxu0 %v2457
          %2775 = vmatprep.subr.bf16.mxu0 %v2454
          %2776 = vmatpush2.bf16.msra.mxu0 %v2453
          %2777 = vmatprep.subr.bf16.mxu0 %v2450
          %2778 = vmatpush2.bf16.msra.mxu0 %v2449
          %2779 = vmatprep.subr.bf16.mxu0 %v2446
          %2780 = vmatpush2.bf16.msra.mxu0 %v2445
          %2781 = vmatprep.mubr.bf16.mxu0 %v2009
          %2782 = vmatmul.mubr.bf16.gmra.mxu0 %v2008
          %v2783 = vpop.f32.mrf.mxu0
          %v2784 = vadd.f32 %v2025, %v2783
          %v2785 = vpop.f32.mrf.mxu0
          %v2786 = vadd.f32 %v2026, %v2785
          %v2787 = vpop.f32.mrf.mxu0
          %v2788 = vpop.f32.mrf.mxu0
          %2789 = vdwg.mxu0
          %2790 = vmatprep.subr.bf16.mxu0 %v2506
          %2791 = vmatpush1.bf16.msra.mxu0 %v2505
          %2792 = vmatprep.subr.bf16.mxu0 %v2502
          %2793 = vmatpush1.bf16.msra.mxu0 %v2501
          %2794 = vmatprep.subr.bf16.mxu0 %v2498
          %2795 = vmatpush1.bf16.msra.mxu0 %v2497
          %2796 = vmatprep.subr.bf16.mxu0 %v2494
          %2797 = vmatpush1.bf16.msra.mxu0 %v2493
          %2798 = vmatprep.subr.bf16.mxu0 %v2490
          %2799 = vmatpush1.bf16.msra.mxu0 %v2489
          %2800 = vmatprep.subr.bf16.mxu0 %v2486
          %2801 = vmatpush1.bf16.msra.mxu0 %v2485
          %2802 = vmatprep.subr.bf16.mxu0 %v2482
          %2803 = vmatpush1.bf16.msra.mxu0 %v2481
          %2804 = vmatprep.subr.bf16.mxu0 %v2478
          %2805 = vmatpush1.bf16.msra.mxu0 %v2477
          %2806 = vmatprep.subr.bf16.mxu0 %v2538
          %2807 = vmatpush2.bf16.msra.mxu0 %v2537
          %2808 = vmatprep.subr.bf16.mxu0 %v2534
          %2809 = vmatpush2.bf16.msra.mxu0 %v2533
          %2810 = vmatprep.subr.bf16.mxu0 %v2530
          %2811 = vmatpush2.bf16.msra.mxu0 %v2529
          %2812 = vmatprep.subr.bf16.mxu0 %v2526
          %2813 = vmatpush2.bf16.msra.mxu0 %v2525
          %2814 = vmatprep.subr.bf16.mxu0 %v2522
          %2815 = vmatpush2.bf16.msra.mxu0 %v2521
          %2816 = vmatprep.subr.bf16.mxu0 %v2518
          %2817 = vmatpush2.bf16.msra.mxu0 %v2517
          %2818 = vmatprep.subr.bf16.mxu0 %v2514
          %2819 = vmatpush2.bf16.msra.mxu0 %v2513
          %2820 = vmatprep.subr.bf16.mxu0 %v2510
          %2821 = vmatpush2.bf16.msra.mxu0 %v2509
          %2822 = vmatprep.mubr.bf16.mxu0 %v2011
          %2823 = vmatmul.mubr.bf16.gmra.mxu0 %v2010
          %v2824 = vpop.f32.mrf.mxu0
          %v2825 = vadd.f32 %v2784, %v2824
          %v2826 = vpop.f32.mrf.mxu0
          %v2827 = vadd.f32 %v2786, %v2826
          %v2828 = vpop.f32.mrf.mxu0
          %v2829 = vpop.f32.mrf.mxu0
          %2830 = vdwg.mxu0
          %s2831 = smul.addr %s2014, 8
          %s2832 = scalar_lea.vmem [#allocation2], %s2831
          %2833 = vst [vmem:[%s2832] sm:$0xff] %v2743
          %2834 = vst [vmem:[%s2832 + $0x8] sm:$0xff] %v2745
          %2835 = vst [vmem:[%s2832 + $0x10] sm:$0xff] %v2825
          %2836 = vst [vmem:[%s2832 + $0x18] sm:$0xff] %v2827
          %p2837 = scmp.eq.s32.totalorder %s32, 7
          // Predicated region
          $region77: #{tpu_custom_call.1} parent=75 // pred_check
            %p2838 = pneg %p2837
          $region78: #{tpu_custom_call.1} parent=75 // pred_check_branch
            %2840 = sbr.rel (%p2838) target = $region80
          $region79: #{tpu_custom_call.1} parent=75 // pred_region
            %v2841 = vrot.slane %v2743, 4
            %v2842 = vmax.f32 %v2743, %v2841
            %v2843 = vrot.slane %v2842, 2
            %v2844 = vmax.f32 %v2842, %v2843
            %v2845 = vrot.slane %v2844, 1
            %v2846 = vmax.f32 %v2844, %v2845
            %v2847 = vrot.slane %v2745, 4
            %v2848 = vmax.f32 %v2745, %v2847
            %v2849 = vrot.slane %v2848, 2
            %v2850 = vmax.f32 %v2848, %v2849
            %v2851 = vrot.slane %v2850, 1
            %v2852 = vmax.f32 %v2850, %v2851
            %v2853 = vrot.slane %v2825, 4
            %v2854 = vmax.f32 %v2825, %v2853
            %v2855 = vrot.slane %v2854, 2
            %v2856 = vmax.f32 %v2854, %v2855
            %v2857 = vrot.slane %v2856, 1
            %v2858 = vmax.f32 %v2856, %v2857
            %v2859 = vrot.slane %v2827, 4
            %v2860 = vmax.f32 %v2827, %v2859
            %v2861 = vrot.slane %v2860, 2
            %v2862 = vmax.f32 %v2860, %v2861
            %v2863 = vrot.slane %v2862, 1
            %v2864 = vmax.f32 %v2862, %v2863
            %v2865 = vsub.f32 %v2743, %v2846
            %v2866 = vsub.f32 %v2745, %v2852
            %v2867 = vsub.f32 %v2825, %v2858
            %v2868 = vsub.f32 %v2827, %v2864
            %v2869 = vmul.f32 %v2865, 1.442695
            %v2870 = vpow.pop %v2869
            %v2871 = vmul.f32 %v2866, 1.442695
            %v2872 = vpow.pop %v2871
            %v2873 = vmul.f32 %v2867, 1.442695
            %v2874 = vpow.pop %v2873
            %v2875 = vmul.f32 %v2868, 1.442695
            %v2876 = vpow.pop %v2875
            %v2877 = vrot.slane %v2870, 4
            %v2878 = vadd.f32 %v2870, %v2877
            %v2879 = vrot.slane %v2878, 2
            %v2880 = vadd.f32 %v2878, %v2879
            %v2881 = vrot.slane %v2880, 1
            %v2882 = vadd.f32 %v2880, %v2881
            %v2883 = vrot.slane %v2872, 4
            %v2884 = vadd.f32 %v2872, %v2883
            %v2885 = vrot.slane %v2884, 2
            %v2886 = vadd.f32 %v2884, %v2885
            %v2887 = vrot.slane %v2886, 1
            %v2888 = vadd.f32 %v2886, %v2887
            %v2889 = vrot.slane %v2874, 4
            %v2890 = vadd.f32 %v2874, %v2889
            %v2891 = vrot.slane %v2890, 2
            %v2892 = vadd.f32 %v2890, %v2891
            %v2893 = vrot.slane %v2892, 1
            %v2894 = vadd.f32 %v2892, %v2893
            %v2895 = vrot.slane %v2876, 4
            %v2896 = vadd.f32 %v2876, %v2895
            %v2897 = vrot.slane %v2896, 2
            %v2898 = vadd.f32 %v2896, %v2897
            %v2899 = vrot.slane %v2898, 1
            %v2900 = vadd.f32 %v2898, %v2899
            %v2901 = vlog2.pop %v2882
            %v2902 = vmul.f32 %v2901, 0.6931472
            %v2903 = vlog2.pop %v2888
            %v2904 = vmul.f32 %v2903, 0.6931472
            %v2905 = vlog2.pop %v2894
            %v2906 = vmul.f32 %v2905, 0.6931472
            %v2907 = vlog2.pop %v2900
            %v2908 = vmul.f32 %v2907, 0.6931472
            %v2909 = vsub.f32 %v2865, %v2902
            %v2910 = vsub.f32 %v2866, %v2904
            %v2911 = vsub.f32 %v2867, %v2906
            %v2912 = vsub.f32 %v2868, %v2908
            %2913 = vst [vmem:[%s378] sm:$0xff] %v2909
            %2914 = vst [vmem:[%s378 + $0x8] sm:$0xff] %v2910
            %2915 = vst [vmem:[%s378 + $0x10] sm:$0xff] %v2911
            %2916 = vst [vmem:[%s378 + $0x18] sm:$0xff] %v2912
          $region80: #{tpu_custom_call.1} parent=75 // pred_fallthru
            _
        $region76: #{tpu_custom_call.1} parent=47 // pred_fallthru
          _
        %s2917 = sand.u32 %s217, 1
        %s2918 = scalar_lea.sflag [#allocation6], %s2917
        %s2919 = sand.u32 %s217, 1
        %s2920 = smul.addr %s2919, 32
        %s2921 = scalar_lea.vmem [#allocation11], %s2920
        // Predicated region
        $region81: #{tpu_custom_call.1} parent=47 // pred_check
          %p2922 = pneg %p227
        $region82: #{tpu_custom_call.1} parent=47 // pred_check_branch
          %2924 = sbr.rel (%p2922) target = $region84
        $region83: #{tpu_custom_call.1} parent=47 // pred_region
          %p2925 = scmp.eq.s32.totalorder %s32, 7
          %s2926 = scalar_select %p2925, %s33, 0
          %s2927 = smul.u32 4, %s2926
          %s2929 = ssub.s32 512, 512
          %2930 = vsyncadd %s2918, %s2929
          %s2931 = smul.addr %s2927, 128
          %s2932 = scalar_lea.hbm %s7, %s2931
          %s2934 = sshll.u32 %s2921, 4
          %s2935 = int_to_ptr.vmem [resolvable:$true] %s2934
          %2937 = dma.vmem_to_hbm [thread:$0]  %s2935, 512, %s2932, %s2918
        $region84: #{tpu_custom_call.1} parent=47 // pred_fallthru
          _
      $region48: #{tpu_custom_call.1} parent=5 // pred_fallthru
        _
      %p2938 = scmp.le.s32.totalorder 2, %s23
      // Predicated region
      $region85: #{tpu_custom_call.1} parent=5 // pred_check
        %p2939 = pneg %p2938
      $region86: #{tpu_custom_call.1} parent=5 // pred_check_branch
        %2941 = sbr.rel (%p2939) target = $region88
      $region87: #{tpu_custom_call.1} parent=5 // pred_region
        %s2942 = ssub.s32 %s23, 2
        // Predicated region
        $region89: #{tpu_custom_call.1} parent=87 // pred_check
          %p2943 = pneg %p233
        $region90: #{tpu_custom_call.1} parent=87 // pred_check_branch
          %2945 = sbr.rel (%p2943) target = $region92
        $region91: #{tpu_custom_call.1} parent=87 // pred_region
          %s2946 = sand.u32 %s218, 1
          %s2947 = scalar_lea.sflag [#allocation6], %s2946
          %s2948 = sand.u32 %s218, 1
          %s2949 = smul.addr %s2948, 32
          %s2950 = scalar_lea.vmem [#allocation11], %s2949
          %2951 = dma.done %s2947, 512
        $region92: #{tpu_custom_call.1} parent=87 // pred_fallthru
          _
      $region88: #{tpu_custom_call.1} parent=5 // pred_fallthru
        _
    $region6: #{tpu_custom_call.1} parent=1 // loop_footer
      %s27 = sadd.s32 1, %s23
    $region7: #{tpu_custom_call.1} parent=1 // loop_footer_branch
      %22 = sbr.rel target = $region3
    $region8: #{tpu_custom_call.1} parent=1 // loop_exit
      _
    %2952 = vsyncpa [#allocation5], 1
    %s2953 = scalar_lea.sflag [#allocation5], 1
    %2954 = vsyncpa %s2953, 1
    %2955 = vsyncpa [#allocation9], 1
    %s2956 = scalar_lea.sflag [#allocation9], 1
    %2957 = vsyncpa %s2956, 1
    %2958 = vsyncpa [#allocation6], 1
    %s2959 = scalar_lea.sflag [#allocation6], 1
    %2960 = vsyncpa %s2959, 1
    %2961 = vsyncpa [#allocation7], 1
    %s2962 = scalar_lea.sflag [#allocation7], 1
    %2963 = vsyncpa %s2962, 1

</llo_original>
